<compile_context>
chip_gen: v6e
topology: v6e:2x2x1
jax: 0.10.0
libtpu: 0.0.40
codegen_flags: <defaults>
</compile_context>

<pallas_src>
import functools

import jax
import jax.numpy as jnp
from jax.experimental import pallas as pl
from jax.experimental.pallas import tpu as pltpu

LN_EPS = 1e-6


def _resrnn_recurrent_kernel(init_hx_ref, xp_ref, w1h_ref, gamma_ref, beta_ref,
                             w2_ref, b2_ref, out_ref, hx_ref, *, matmul_dtype):
    """One grid step processes a block of T timesteps.

    xp_ref : (Bp, T, hsize)  precomputed x_t @ W1x + b1 for this time chunk (f32)
    out_ref: (Bp, T*isize)   lane-dense packed hidden states for this chunk
    hx_ref : (Bp, osize)     persistent recurrent state (f32 VMEM scratch)
    """
    Bp, T, hsize = xp_ref.shape
    isize = w2_ref.shape[1]

    # Initialize the recurrent state on the first chunk (init_hx broadcast over batch).
    @pl.when(pl.program_id(0) == 0)
    def _():
        hx_ref[...] = jnp.broadcast_to(init_hx_ref[...], hx_ref.shape)

    # Stationary operands: load / broadcast once per grid step, outside the time loop.
    w1h = w1h_ref[...]                                        # (osize, hsize) bf16
    w2 = w2_ref[...]                                          # (hsize, isize) bf16
    gamma = jnp.broadcast_to(gamma_ref[...], (Bp, hsize))     # f32
    beta = jnp.broadcast_to(beta_ref[...], (Bp, hsize))       # f32
    b2 = jnp.broadcast_to(b2_ref[...], (Bp, isize))           # f32

    hx = hx_ref[...]                                          # (Bp, osize) f32 carry
    outs = []
    for t in range(T):                                        # static unroll over chunk
        # concat(x_t, hx) @ W1 + b1 == (x_t @ W1x + b1) [precomputed] + hx @ W1h
        h = xp_ref[:, t, :] + jnp.dot(hx.astype(matmul_dtype), w1h,
                                      preferred_element_type=jnp.float32)
        # LayerNorm(hsize, eps=1e-6) with elementwise affine — f32 on the VPU.
        mean = jnp.mean(h, axis=-1, keepdims=True)
        var = jnp.mean(jnp.square(h - mean), axis=-1, keepdims=True)
        hn = (h - mean) * jax.lax.rsqrt(var + LN_EPS) * gamma + beta
        a = jnp.maximum(hn, 0.0)                              # ReLU
        # Linear(hsize -> isize) + residual with previous hidden state.
        hx = jnp.dot(a.astype(matmul_dtype), w2,
                     preferred_element_type=jnp.float32) + b2 + hx
        outs.append(hx)

    hx_ref[...] = hx
    # Single lane-dense (Bp, T*isize) store per chunk (instead of T masked isize-wide
    # stores) -> unmasked vst + one HBM writeback DMA per grid step.
    out_ref[...] = jnp.concatenate(outs, axis=-1).astype(out_ref.dtype)


def resrnn_forward(x, params, *, time_block=8, matmul_dtype=jnp.bfloat16):
    """x: (B, L, isize) float32.  Returns (B, L, isize)."""
    B, L, isize = x.shape
    osize = params["init_hx"].shape[-1]
    hsize = params["w1x"].shape[-1]

    T = min(time_block, L)
    assert L % T == 0, "sequence length must be divisible by time_block"
    n_chunks = L // T

    # Pad batch to a multiple of 8 (f32 sublane) so the per-step (Bp, *) tiles are
    # sublane-aligned.  Padded rows are zeros; they are sliced off the output below.
    Bp = ((B + 7) // 8) * 8
    if Bp != B:
        x = jnp.pad(x, ((0, Bp - B), (0, 0), (0, 0)))

    cast = lambda a: a.astype(matmul_dtype)

    # Hoisted, time-parallel input projection: one (Bp*L, isize) @ (isize, hsize) GEMM
    # (bf16 operands, f32 accumulation) instead of L tiny MXU-starved matmuls inside the
    # recurrence.  At production sizes this can also be a dedicated tiled pallas matmul.
    xproj = jnp.dot(cast(x.reshape(Bp * L, isize)), cast(params["w1x"]),
                    preferred_element_type=jnp.float32) + params["b1"]
    xproj = xproj.reshape(Bp, L, hsize)

    kernel = functools.partial(_resrnn_recurrent_kernel, matmul_dtype=matmul_dtype)
    stationary = lambda shape: pl.BlockSpec(shape, lambda c: (0, 0))

    out_packed = pl.pallas_call(
        kernel,
        out_shape=jax.ShapeDtypeStruct((Bp, n_chunks, T * isize), x.dtype),
        grid_spec=pltpu.PrefetchScalarGridSpec(
            num_scalar_prefetch=0,
            grid=(n_chunks,),
            in_specs=[
                stationary((1, osize)),                              # init_hx (f32)
                pl.BlockSpec((Bp, T, hsize), lambda c: (0, c, 0)),   # xproj time chunk
                stationary((osize, hsize)),                          # w1h (bf16)
                stationary((1, hsize)),                              # ln gamma
                stationary((1, hsize)),                              # ln beta
                stationary((hsize, isize)),                          # w2 (bf16)
                stationary((1, isize)),                              # b2
            ],
            # None => squeezed chunk dim: kernel sees a 2-D, lane-dense (Bp, T*isize) ref.
            out_specs=pl.BlockSpec((Bp, None, T * isize), lambda c: (0, c, 0)),
            scratch_shapes=[pltpu.VMEM((Bp, osize), jnp.float32)],   # persistent hx
        ),
        compiler_params=pltpu.CompilerParams(
            # Recurrence across time chunks: must run sequentially on one core.
            dimension_semantics=("arbitrary",),
            # Explicit scoped-VMEM budget (stationary weights + pipelined xproj/out
            # blocks); raise further on v6e / shrink weights to bf16 for v7x at large isize.
            vmem_limit_bytes=48 * 1024 * 1024,
        ),
    )(params["init_hx"], xproj, cast(params["w1h"]), params["gamma"],
      params["beta"], cast(params["w2"]), params["b2"])

    # (Bp, n_chunks, T*isize) -> (Bp, L, isize) is a pure contiguous reshape (no transpose).
    return out_packed.reshape(Bp, L, isize)[:B]


def resrnn_reference(x, params, matmul_dtype=jnp.float32):
    """Pure-JAX reference matching the PyTorch forward (states=None).

    With matmul_dtype=jnp.float32 this is the exact module semantics; with
    jnp.bfloat16 it mirrors the kernel's bf16-matmul / f32-accumulate arithmetic.
    """
    B, L, isize = x.shape
    cast = lambda a: a.astype(matmul_dtype)
    hx = jnp.broadcast_to(params["init_hx"], (B, params["init_hx"].shape[-1]))
    outs = []
    for t in range(L):
        xu = x[:, t, :]
        h = (jnp.dot(cast(xu), cast(params["w1x"]), preferred_element_type=jnp.float32)
             + jnp.dot(cast(hx), cast(params["w1h"]), preferred_element_type=jnp.float32)
             + params["b1"])
        mean = jnp.mean(h, axis=-1, keepdims=True)
        var = jnp.mean(jnp.square(h - mean), axis=-1, keepdims=True)
        hn = (h - mean) * jax.lax.rsqrt(var + LN_EPS) * params["gamma"] + params["beta"]
        a = jnp.maximum(hn, 0.0)
        hx = (jnp.dot(cast(a), cast(params["w2"]), preferred_element_type=jnp.float32)
              + params["b2"] + hx)
        outs.append(hx)
    return jnp.stack(outs, axis=1)


def make_params(key, isize, osize, hsize):
    k1, k2, k3, k4, k5 = jax.random.split(key, 5)
    scale1 = 1.0 / jnp.sqrt(isize + osize)
    scale2 = 1.0 / jnp.sqrt(hsize)
    return {
        # PyTorch Linear weight is (out,in); stored here pre-transposed as (in,out).
        "w1x": jax.random.normal(k1, (isize, hsize), jnp.float32) * scale1,
        "w1h": jax.random.normal(k2, (osize, hsize), jnp.float32) * scale1,
        "b1": jax.random.normal(k3, (1, hsize), jnp.float32) * 0.01,
        "gamma": jnp.ones((1, hsize), jnp.float32),   # nn.LayerNorm init
        "beta": jnp.zeros((1, hsize), jnp.float32),
        "w2": jax.random.normal(k4, (hsize, isize), jnp.float32) * scale2,
        "b2": jax.random.normal(k5, (1, isize), jnp.float32) * 0.01,
        "init_hx": jnp.zeros((1, osize), jnp.float32),  # nn.Parameter(torch.zeros(1,_osize))
    }


if __name__ == "__main__":
    B, L, isize = 2, 8, 32
    osize = isize            # osize defaults to isize
    hsize = 4 * osize        # hsize defaults to 4 * osize

    key = jax.random.PRNGKey(0)
    kx, kp = jax.random.split(key)
    x = jax.random.normal(kx, (B, L, isize), jnp.float32)
    params = make_params(kp, isize, osize, hsize)

    out = resrnn_forward(x, params, time_block=8, matmul_dtype=jnp.bfloat16)
    out = jax.block_until_ready(out)
    assert out.shape == (B, L, isize)
    assert bool(jnp.all(jnp.isfinite(out)))

    # Tight check vs. a reference that mirrors the kernel's bf16-matmul arithmetic.
    ref_bf16 = resrnn_reference(x, params, matmul_dtype=jnp.bfloat16)
    assert jnp.allclose(out, ref_bf16, rtol=2e-3, atol=2e-3), "mismatch vs bf16-matched reference"

    # Sanity check vs. the exact f32 module semantics (difference is bf16 rounding only).
    ref_f32 = resrnn_reference(x, params, matmul_dtype=jnp.float32)
    assert jnp.allclose(out, ref_f32, rtol=5e-2, atol=1e-1), "mismatch vs f32 reference"

    print("KERNEL_OK")
</pallas_src>

<mosaic_0001>
module attributes {stable_mosaic.version = 11 : i64} {
  func.func @_resrnn_recurrent_kernel(%arg0: i32, %arg1: memref<1x32xf32, #tpu.memory_space<vmem>>, %arg2: memref<8x8x128xf32, #tpu.memory_space<vmem>>, %arg3: memref<32x128xbf16, #tpu.memory_space<vmem>>, %arg4: memref<1x128xf32, #tpu.memory_space<vmem>>, %arg5: memref<1x128xf32, #tpu.memory_space<vmem>>, %arg6: memref<128x32xbf16, #tpu.memory_space<vmem>>, %arg7: memref<1x32xf32, #tpu.memory_space<vmem>>, %arg8: memref<8x1x256xf32, #tpu.memory_space<vmem>>, %arg9: memref<8x32xf32, #tpu.memory_space<vmem>>) attributes {dimension_semantics = [#tpu.dimension_semantics<arbitrary>], iteration_bounds = array<i64: 1>, scalar_prefetch = 0 : i64, scratch_operands = 1 : i64, tpu.core_type = #tpu.core_type<tc>, window_params = [{pipeline_mode = #tpu.pipeline_mode<synchronous>, transform_indices = @transform_0, window_bounds = array<i64: 1, 32>}, {transform_indices = @transform_1, window_bounds = array<i64: 8, 8, 128>}, {pipeline_mode = #tpu.pipeline_mode<synchronous>, transform_indices = @transform_2, window_bounds = array<i64: 32, 128>}, {pipeline_mode = #tpu.pipeline_mode<synchronous>, transform_indices = @transform_3, window_bounds = array<i64: 1, 128>}, {pipeline_mode = #tpu.pipeline_mode<synchronous>, transform_indices = @transform_4, window_bounds = array<i64: 1, 128>}, {pipeline_mode = #tpu.pipeline_mode<synchronous>, transform_indices = @transform_5, window_bounds = array<i64: 128, 32>}, {pipeline_mode = #tpu.pipeline_mode<synchronous>, transform_indices = @transform_6, window_bounds = array<i64: 1, 32>}, {transform_indices = @transform_7, window_bounds = array<i64: 8, 1, 256>}]} {
    %c0_i32 = arith.constant 0 : i32
    %0 = arith.cmpi eq, %arg0, %c0_i32 : i32
    %1 = arith.extui %0 : i1 to i32
    %c0_i32_0 = arith.constant 0 : i32
    %2 = arith.cmpi ne, %1, %c0_i32_0 : i32
    scf.if %2 {
      %c0_97 = arith.constant 0 : index
      %c0_98 = arith.constant 0 : index
      %268 = vector.load %arg1[%c0_97, %c0_98] : memref<1x32xf32, #tpu.memory_space<vmem>>, vector<1x32xf32>
      %269 = vector.shape_cast %268 : vector<1x32xf32> to vector<1x32xf32>
      %270 = vector.broadcast %269 : vector<1x32xf32> to vector<8x32xf32>
      %c0_99 = arith.constant 0 : index
      %c0_100 = arith.constant 0 : index
      %271 = vector.load %arg9[%c0_99, %c0_100] : memref<8x32xf32, #tpu.memory_space<vmem>>, vector<8x32xf32>
      tpu.vector_store %arg9[%c0_99, %c0_100], %270 {strides = array<i32>} : memref<8x32xf32, #tpu.memory_space<vmem>>, vector<8x32xf32>,
    } else {
    }
    %c0 = arith.constant 0 : index
    %c0_1 = arith.constant 0 : index
    %3 = vector.load %arg3[%c0, %c0_1] : memref<32x128xbf16, #tpu.memory_space<vmem>>, vector<32x128xbf16>
    %c0_2 = arith.constant 0 : index
    %c0_3 = arith.constant 0 : index
    %4 = vector.load %arg6[%c0_2, %c0_3] : memref<128x32xbf16, #tpu.memory_space<vmem>>, vector<128x32xbf16>
    %c0_4 = arith.constant 0 : index
    %c0_5 = arith.constant 0 : index
    %5 = vector.load %arg4[%c0_4, %c0_5] : memref<1x128xf32, #tpu.memory_space<vmem>>, vector<1x128xf32>
    %6 = vector.shape_cast %5 : vector<1x128xf32> to vector<1x128xf32>
    %7 = vector.broadcast %6 : vector<1x128xf32> to vector<8x128xf32>
    %c0_6 = arith.constant 0 : index
    %c0_7 = arith.constant 0 : index
    %8 = vector.load %arg5[%c0_6, %c0_7] : memref<1x128xf32, #tpu.memory_space<vmem>>, vector<1x128xf32>
    %9 = vector.shape_cast %8 : vector<1x128xf32> to vector<1x128xf32>
    %10 = vector.broadcast %9 : vector<1x128xf32> to vector<8x128xf32>
    %c0_8 = arith.constant 0 : index
    %c0_9 = arith.constant 0 : index
    %11 = vector.load %arg7[%c0_8, %c0_9] : memref<1x32xf32, #tpu.memory_space<vmem>>, vector<1x32xf32>
    %12 = vector.shape_cast %11 : vector<1x32xf32> to vector<1x32xf32>
    %13 = vector.broadcast %12 : vector<1x32xf32> to vector<8x32xf32>
    %c0_10 = arith.constant 0 : index
    %c0_11 = arith.constant 0 : index
    %14 = vector.load %arg9[%c0_10, %c0_11] : memref<8x32xf32, #tpu.memory_space<vmem>>, vector<8x32xf32>
    %c0_12 = arith.constant 0 : index
    %c0_13 = arith.constant 0 : index
    %c0_14 = arith.constant 0 : index
    %15 = vector.load %arg2[%c0_12, %c0_13, %c0_14] : memref<8x8x128xf32, #tpu.memory_space<vmem>>, vector<8x1x128xf32>
    %16 = vector.shape_cast %15 : vector<8x1x128xf32> to vector<8x128xf32>
    %17 = arith.truncf %14 : vector<8x32xf32> to vector<8x32xbf16>
    %cst = arith.constant dense<0.000000e+00> : vector<8x128xf32>
    %18 = tpu.matmul %17, %3, %cst {dimension_numbers = #tpu.dot_dimension_numbers<[1], [0], [0], [1], [0, 0, 1, 1], [], []>} : vector<8x32xbf16>, vector<32x128xbf16>, vector<8x128xf32> -> vector<8x128xf32>
    %19 = arith.addf %16, %18 : vector<8x128xf32>
    %cst_15 = arith.constant dense<0.000000e+00> : vector<8xf32>
    %20 = vector.multi_reduction <add>, %19, %cst_15 [1] : vector<8x128xf32> to vector<8xf32>
    %21 = vector.shape_cast %20 : vector<8xf32> to vector<8x1xf32>
    %cst_16 = arith.constant 1.280000e+02 : f32
    %22 = vector.broadcast %cst_16 : f32 to vector<8x1xf32>
    %23 = arith.divf %21, %22 : vector<8x1xf32>
    %24 = vector.broadcast %23 : vector<8x1xf32> to vector<8x128xf32>
    %25 = arith.subf %19, %24 : vector<8x128xf32>
    %26 = arith.mulf %25, %25 : vector<8x128xf32>
    %cst_17 = arith.constant dense<0.000000e+00> : vector<8xf32>
    %27 = vector.multi_reduction <add>, %26, %cst_17 [1] : vector<8x128xf32> to vector<8xf32>
    %28 = vector.shape_cast %27 : vector<8xf32> to vector<8x1xf32>
    %cst_18 = arith.constant 1.280000e+02 : f32
    %29 = vector.broadcast %cst_18 : f32 to vector<8x1xf32>
    %30 = arith.divf %28, %29 : vector<8x1xf32>
    %31 = vector.broadcast %23 : vector<8x1xf32> to vector<8x128xf32>
    %32 = arith.subf %19, %31 : vector<8x128xf32>
    %cst_19 = arith.constant 9.99999997E-7 : f32
    %33 = vector.broadcast %cst_19 : f32 to vector<8x1xf32>
    %34 = arith.addf %30, %33 : vector<8x1xf32>
    %35 = math.rsqrt %34 : vector<8x1xf32>
    %36 = vector.broadcast %35 : vector<8x1xf32> to vector<8x128xf32>
    %37 = arith.mulf %32, %36 : vector<8x128xf32>
    %38 = arith.mulf %37, %7 : vector<8x128xf32>
    %39 = arith.addf %38, %10 : vector<8x128xf32>
    %cst_20 = arith.constant 0.000000e+00 : f32
    %40 = vector.broadcast %cst_20 : f32 to vector<8x128xf32>
    %41 = arith.maximumf %39, %40 : vector<8x128xf32>
    %42 = arith.truncf %41 : vector<8x128xf32> to vector<8x128xbf16>
    %cst_21 = arith.constant dense<0.000000e+00> : vector<8x32xf32>
    %43 = tpu.matmul %42, %4, %cst_21 {dimension_numbers = #tpu.dot_dimension_numbers<[1], [0], [0], [1], [0, 0, 1, 1], [], []>} : vector<8x128xbf16>, vector<128x32xbf16>, vector<8x32xf32> -> vector<8x32xf32>
    %44 = arith.addf %43, %13 : vector<8x32xf32>
    %45 = arith.addf %44, %14 : vector<8x32xf32>
    %c0_22 = arith.constant 0 : index
    %c1 = arith.constant 1 : index
    %c0_23 = arith.constant 0 : index
    %46 = vector.load %arg2[%c0_22, %c1, %c0_23] : memref<8x8x128xf32, #tpu.memory_space<vmem>>, vector<8x1x128xf32>
    %47 = vector.shape_cast %46 : vector<8x1x128xf32> to vector<8x128xf32>
    %48 = arith.truncf %45 : vector<8x32xf32> to vector<8x32xbf16>
    %cst_24 = arith.constant dense<0.000000e+00> : vector<8x128xf32>
    %49 = tpu.matmul %48, %3, %cst_24 {dimension_numbers = #tpu.dot_dimension_numbers<[1], [0], [0], [1], [0, 0, 1, 1], [], []>} : vector<8x32xbf16>, vector<32x128xbf16>, vector<8x128xf32> -> vector<8x128xf32>
    %50 = arith.addf %47, %49 : vector<8x128xf32>
    %cst_25 = arith.constant dense<0.000000e+00> : vector<8xf32>
    %51 = vector.multi_reduction <add>, %50, %cst_25 [1] : vector<8x128xf32> to vector<8xf32>
    %52 = vector.shape_cast %51 : vector<8xf32> to vector<8x1xf32>
    %cst_26 = arith.constant 1.280000e+02 : f32
    %53 = vector.broadcast %cst_26 : f32 to vector<8x1xf32>
    %54 = arith.divf %52, %53 : vector<8x1xf32>
    %55 = vector.broadcast %54 : vector<8x1xf32> to vector<8x128xf32>
    %56 = arith.subf %50, %55 : vector<8x128xf32>
    %57 = arith.mulf %56, %56 : vector<8x128xf32>
    %cst_27 = arith.constant dense<0.000000e+00> : vector<8xf32>
    %58 = vector.multi_reduction <add>, %57, %cst_27 [1] : vector<8x128xf32> to vector<8xf32>
    %59 = vector.shape_cast %58 : vector<8xf32> to vector<8x1xf32>
    %cst_28 = arith.constant 1.280000e+02 : f32
    %60 = vector.broadcast %cst_28 : f32 to vector<8x1xf32>
    %61 = arith.divf %59, %60 : vector<8x1xf32>
    %62 = vector.broadcast %54 : vector<8x1xf32> to vector<8x128xf32>
    %63 = arith.subf %50, %62 : vector<8x128xf32>
    %cst_29 = arith.constant 9.99999997E-7 : f32
    %64 = vector.broadcast %cst_29 : f32 to vector<8x1xf32>
    %65 = arith.addf %61, %64 : vector<8x1xf32>
    %66 = math.rsqrt %65 : vector<8x1xf32>
    %67 = vector.broadcast %66 : vector<8x1xf32> to vector<8x128xf32>
    %68 = arith.mulf %63, %67 : vector<8x128xf32>
    %69 = arith.mulf %68, %7 : vector<8x128xf32>
    %70 = arith.addf %69, %10 : vector<8x128xf32>
    %cst_30 = arith.constant 0.000000e+00 : f32
    %71 = vector.broadcast %cst_30 : f32 to vector<8x128xf32>
    %72 = arith.maximumf %70, %71 : vector<8x128xf32>
    %73 = arith.truncf %72 : vector<8x128xf32> to vector<8x128xbf16>
    %cst_31 = arith.constant dense<0.000000e+00> : vector<8x32xf32>
    %74 = tpu.matmul %73, %4, %cst_31 {dimension_numbers = #tpu.dot_dimension_numbers<[1], [0], [0], [1], [0, 0, 1, 1], [], []>} : vector<8x128xbf16>, vector<128x32xbf16>, vector<8x32xf32> -> vector<8x32xf32>
    %75 = arith.addf %74, %13 : vector<8x32xf32>
    %76 = arith.addf %75, %45 : vector<8x32xf32>
    %c0_32 = arith.constant 0 : index
    %c2 = arith.constant 2 : index
    %c0_33 = arith.constant 0 : index
    %77 = vector.load %arg2[%c0_32, %c2, %c0_33] : memref<8x8x128xf32, #tpu.memory_space<vmem>>, vector<8x1x128xf32>
    %78 = vector.shape_cast %77 : vector<8x1x128xf32> to vector<8x128xf32>
    %79 = arith.truncf %76 : vector<8x32xf32> to vector<8x32xbf16>
    %cst_34 = arith.constant dense<0.000000e+00> : vector<8x128xf32>
    %80 = tpu.matmul %79, %3, %cst_34 {dimension_numbers = #tpu.dot_dimension_numbers<[1], [0], [0], [1], [0, 0, 1, 1], [], []>} : vector<8x32xbf16>, vector<32x128xbf16>, vector<8x128xf32> -> vector<8x128xf32>
    %81 = arith.addf %78, %80 : vector<8x128xf32>
    %cst_35 = arith.constant dense<0.000000e+00> : vector<8xf32>
    %82 = vector.multi_reduction <add>, %81, %cst_35 [1] : vector<8x128xf32> to vector<8xf32>
    %83 = vector.shape_cast %82 : vector<8xf32> to vector<8x1xf32>
    %cst_36 = arith.constant 1.280000e+02 : f32
    %84 = vector.broadcast %cst_36 : f32 to vector<8x1xf32>
    %85 = arith.divf %83, %84 : vector<8x1xf32>
    %86 = vector.broadcast %85 : vector<8x1xf32> to vector<8x128xf32>
    %87 = arith.subf %81, %86 : vector<8x128xf32>
    %88 = arith.mulf %87, %87 : vector<8x128xf32>
    %cst_37 = arith.constant dense<0.000000e+00> : vector<8xf32>
    %89 = vector.multi_reduction <add>, %88, %cst_37 [1] : vector<8x128xf32> to vector<8xf32>
    %90 = vector.shape_cast %89 : vector<8xf32> to vector<8x1xf32>
    %cst_38 = arith.constant 1.280000e+02 : f32
    %91 = vector.broadcast %cst_38 : f32 to vector<8x1xf32>
    %92 = arith.divf %90, %91 : vector<8x1xf32>
    %93 = vector.broadcast %85 : vector<8x1xf32> to vector<8x128xf32>
    %94 = arith.subf %81, %93 : vector<8x128xf32>
    %cst_39 = arith.constant 9.99999997E-7 : f32
    %95 = vector.broadcast %cst_39 : f32 to vector<8x1xf32>
    %96 = arith.addf %92, %95 : vector<8x1xf32>
    %97 = math.rsqrt %96 : vector<8x1xf32>
    %98 = vector.broadcast %97 : vector<8x1xf32> to vector<8x128xf32>
    %99 = arith.mulf %94, %98 : vector<8x128xf32>
    %100 = arith.mulf %99, %7 : vector<8x128xf32>
    %101 = arith.addf %100, %10 : vector<8x128xf32>
    %cst_40 = arith.constant 0.000000e+00 : f32
    %102 = vector.broadcast %cst_40 : f32 to vector<8x128xf32>
    %103 = arith.maximumf %101, %102 : vector<8x128xf32>
    %104 = arith.truncf %103 : vector<8x128xf32> to vector<8x128xbf16>
    %cst_41 = arith.constant dense<0.000000e+00> : vector<8x32xf32>
    %105 = tpu.matmul %104, %4, %cst_41 {dimension_numbers = #tpu.dot_dimension_numbers<[1], [0], [0], [1], [0, 0, 1, 1], [], []>} : vector<8x128xbf16>, vector<128x32xbf16>, vector<8x32xf32> -> vector<8x32xf32>
    %106 = arith.addf %105, %13 : vector<8x32xf32>
    %107 = arith.addf %106, %76 : vector<8x32xf32>
    %c0_42 = arith.constant 0 : index
    %c3 = arith.constant 3 : index
    %c0_43 = arith.constant 0 : index
    %108 = vector.load %arg2[%c0_42, %c3, %c0_43] : memref<8x8x128xf32, #tpu.memory_space<vmem>>, vector<8x1x128xf32>
    %109 = vector.shape_cast %108 : vector<8x1x128xf32> to vector<8x128xf32>
    %110 = arith.truncf %107 : vector<8x32xf32> to vector<8x32xbf16>
    %cst_44 = arith.constant dense<0.000000e+00> : vector<8x128xf32>
    %111 = tpu.matmul %110, %3, %cst_44 {dimension_numbers = #tpu.dot_dimension_numbers<[1], [0], [0], [1], [0, 0, 1, 1], [], []>} : vector<8x32xbf16>, vector<32x128xbf16>, vector<8x128xf32> -> vector<8x128xf32>
    %112 = arith.addf %109, %111 : vector<8x128xf32>
    %cst_45 = arith.constant dense<0.000000e+00> : vector<8xf32>
    %113 = vector.multi_reduction <add>, %112, %cst_45 [1] : vector<8x128xf32> to vector<8xf32>
    %114 = vector.shape_cast %113 : vector<8xf32> to vector<8x1xf32>
    %cst_46 = arith.constant 1.280000e+02 : f32
    %115 = vector.broadcast %cst_46 : f32 to vector<8x1xf32>
    %116 = arith.divf %114, %115 : vector<8x1xf32>
    %117 = vector.broadcast %116 : vector<8x1xf32> to vector<8x128xf32>
    %118 = arith.subf %112, %117 : vector<8x128xf32>
    %119 = arith.mulf %118, %118 : vector<8x128xf32>
    %cst_47 = arith.constant dense<0.000000e+00> : vector<8xf32>
    %120 = vector.multi_reduction <add>, %119, %cst_47 [1] : vector<8x128xf32> to vector<8xf32>
    %121 = vector.shape_cast %120 : vector<8xf32> to vector<8x1xf32>
    %cst_48 = arith.constant 1.280000e+02 : f32
    %122 = vector.broadcast %cst_48 : f32 to vector<8x1xf32>
    %123 = arith.divf %121, %122 : vector<8x1xf32>
    %124 = vector.broadcast %116 : vector<8x1xf32> to vector<8x128xf32>
    %125 = arith.subf %112, %124 : vector<8x128xf32>
    %cst_49 = arith.constant 9.99999997E-7 : f32
    %126 = vector.broadcast %cst_49 : f32 to vector<8x1xf32>
    %127 = arith.addf %123, %126 : vector<8x1xf32>
    %128 = math.rsqrt %127 : vector<8x1xf32>
    %129 = vector.broadcast %128 : vector<8x1xf32> to vector<8x128xf32>
    %130 = arith.mulf %125, %129 : vector<8x128xf32>
    %131 = arith.mulf %130, %7 : vector<8x128xf32>
    %132 = arith.addf %131, %10 : vector<8x128xf32>
    %cst_50 = arith.constant 0.000000e+00 : f32
    %133 = vector.broadcast %cst_50 : f32 to vector<8x128xf32>
    %134 = arith.maximumf %132, %133 : vector<8x128xf32>
    %135 = arith.truncf %134 : vector<8x128xf32> to vector<8x128xbf16>
    %cst_51 = arith.constant dense<0.000000e+00> : vector<8x32xf32>
    %136 = tpu.matmul %135, %4, %cst_51 {dimension_numbers = #tpu.dot_dimension_numbers<[1], [0], [0], [1], [0, 0, 1, 1], [], []>} : vector<8x128xbf16>, vector<128x32xbf16>, vector<8x32xf32> -> vector<8x32xf32>
    %137 = arith.addf %136, %13 : vector<8x32xf32>
    %138 = arith.addf %137, %107 : vector<8x32xf32>
    %c0_52 = arith.constant 0 : index
    %c4 = arith.constant 4 : index
    %c0_53 = arith.constant 0 : index
    %139 = vector.load %arg2[%c0_52, %c4, %c0_53] : memref<8x8x128xf32, #tpu.memory_space<vmem>>, vector<8x1x128xf32>
    %140 = vector.shape_cast %139 : vector<8x1x128xf32> to vector<8x128xf32>
    %141 = arith.truncf %138 : vector<8x32xf32> to vector<8x32xbf16>
    %cst_54 = arith.constant dense<0.000000e+00> : vector<8x128xf32>
    %142 = tpu.matmul %141, %3, %cst_54 {dimension_numbers = #tpu.dot_dimension_numbers<[1], [0], [0], [1], [0, 0, 1, 1], [], []>} : vector<8x32xbf16>, vector<32x128xbf16>, vector<8x128xf32> -> vector<8x128xf32>
    %143 = arith.addf %140, %142 : vector<8x128xf32>
    %cst_55 = arith.constant dense<0.000000e+00> : vector<8xf32>
    %144 = vector.multi_reduction <add>, %143, %cst_55 [1] : vector<8x128xf32> to vector<8xf32>
    %145 = vector.shape_cast %144 : vector<8xf32> to vector<8x1xf32>
    %cst_56 = arith.constant 1.280000e+02 : f32
    %146 = vector.broadcast %cst_56 : f32 to vector<8x1xf32>
    %147 = arith.divf %145, %146 : vector<8x1xf32>
    %148 = vector.broadcast %147 : vector<8x1xf32> to vector<8x128xf32>
    %149 = arith.subf %143, %148 : vector<8x128xf32>
    %150 = arith.mulf %149, %149 : vector<8x128xf32>
    %cst_57 = arith.constant dense<0.000000e+00> : vector<8xf32>
    %151 = vector.multi_reduction <add>, %150, %cst_57 [1] : vector<8x128xf32> to vector<8xf32>
    %152 = vector.shape_cast %151 : vector<8xf32> to vector<8x1xf32>
    %cst_58 = arith.constant 1.280000e+02 : f32
    %153 = vector.broadcast %cst_58 : f32 to vector<8x1xf32>
    %154 = arith.divf %152, %153 : vector<8x1xf32>
    %155 = vector.broadcast %147 : vector<8x1xf32> to vector<8x128xf32>
    %156 = arith.subf %143, %155 : vector<8x128xf32>
    %cst_59 = arith.constant 9.99999997E-7 : f32
    %157 = vector.broadcast %cst_59 : f32 to vector<8x1xf32>
    %158 = arith.addf %154, %157 : vector<8x1xf32>
    %159 = math.rsqrt %158 : vector<8x1xf32>
    %160 = vector.broadcast %159 : vector<8x1xf32> to vector<8x128xf32>
    %161 = arith.mulf %156, %160 : vector<8x128xf32>
    %162 = arith.mulf %161, %7 : vector<8x128xf32>
    %163 = arith.addf %162, %10 : vector<8x128xf32>
    %cst_60 = arith.constant 0.000000e+00 : f32
    %164 = vector.broadcast %cst_60 : f32 to vector<8x128xf32>
    %165 = arith.maximumf %163, %164 : vector<8x128xf32>
    %166 = arith.truncf %165 : vector<8x128xf32> to vector<8x128xbf16>
    %cst_61 = arith.constant dense<0.000000e+00> : vector<8x32xf32>
    %167 = tpu.matmul %166, %4, %cst_61 {dimension_numbers = #tpu.dot_dimension_numbers<[1], [0], [0], [1], [0, 0, 1, 1], [], []>} : vector<8x128xbf16>, vector<128x32xbf16>, vector<8x32xf32> -> vector<8x32xf32>
    %168 = arith.addf %167, %13 : vector<8x32xf32>
    %169 = arith.addf %168, %138 : vector<8x32xf32>
    %c0_62 = arith.constant 0 : index
    %c5 = arith.constant 5 : index
    %c0_63 = arith.constant 0 : index
    %170 = vector.load %arg2[%c0_62, %c5, %c0_63] : memref<8x8x128xf32, #tpu.memory_space<vmem>>, vector<8x1x128xf32>
    %171 = vector.shape_cast %170 : vector<8x1x128xf32> to vector<8x128xf32>
    %172 = arith.truncf %169 : vector<8x32xf32> to vector<8x32xbf16>
    %cst_64 = arith.constant dense<0.000000e+00> : vector<8x128xf32>
    %173 = tpu.matmul %172, %3, %cst_64 {dimension_numbers = #tpu.dot_dimension_numbers<[1], [0], [0], [1], [0, 0, 1, 1], [], []>} : vector<8x32xbf16>, vector<32x128xbf16>, vector<8x128xf32> -> vector<8x128xf32>
    %174 = arith.addf %171, %173 : vector<8x128xf32>
    %cst_65 = arith.constant dense<0.000000e+00> : vector<8xf32>
    %175 = vector.multi_reduction <add>, %174, %cst_65 [1] : vector<8x128xf32> to vector<8xf32>
    %176 = vector.shape_cast %175 : vector<8xf32> to vector<8x1xf32>
    %cst_66 = arith.constant 1.280000e+02 : f32
    %177 = vector.broadcast %cst_66 : f32 to vector<8x1xf32>
    %178 = arith.divf %176, %177 : vector<8x1xf32>
    %179 = vector.broadcast %178 : vector<8x1xf32> to vector<8x128xf32>
    %180 = arith.subf %174, %179 : vector<8x128xf32>
    %181 = arith.mulf %180, %180 : vector<8x128xf32>
    %cst_67 = arith.constant dense<0.000000e+00> : vector<8xf32>
    %182 = vector.multi_reduction <add>, %181, %cst_67 [1] : vector<8x128xf32> to vector<8xf32>
    %183 = vector.shape_cast %182 : vector<8xf32> to vector<8x1xf32>
    %cst_68 = arith.constant 1.280000e+02 : f32
    %184 = vector.broadcast %cst_68 : f32 to vector<8x1xf32>
    %185 = arith.divf %183, %184 : vector<8x1xf32>
    %186 = vector.broadcast %178 : vector<8x1xf32> to vector<8x128xf32>
    %187 = arith.subf %174, %186 : vector<8x128xf32>
    %cst_69 = arith.constant 9.99999997E-7 : f32
    %188 = vector.broadcast %cst_69 : f32 to vector<8x1xf32>
    %189 = arith.addf %185, %188 : vector<8x1xf32>
    %190 = math.rsqrt %189 : vector<8x1xf32>
    %191 = vector.broadcast %190 : vector<8x1xf32> to vector<8x128xf32>
    %192 = arith.mulf %187, %191 : vector<8x128xf32>
    %193 = arith.mulf %192, %7 : vector<8x128xf32>
    %194 = arith.addf %193, %10 : vector<8x128xf32>
    %cst_70 = arith.constant 0.000000e+00 : f32
    %195 = vector.broadcast %cst_70 : f32 to vector<8x128xf32>
    %196 = arith.maximumf %194, %195 : vector<8x128xf32>
    %197 = arith.truncf %196 : vector<8x128xf32> to vector<8x128xbf16>
    %cst_71 = arith.constant dense<0.000000e+00> : vector<8x32xf32>
    %198 = tpu.matmul %197, %4, %cst_71 {dimension_numbers = #tpu.dot_dimension_numbers<[1], [0], [0], [1], [0, 0, 1, 1], [], []>} : vector<8x128xbf16>, vector<128x32xbf16>, vector<8x32xf32> -> vector<8x32xf32>
    %199 = arith.addf %198, %13 : vector<8x32xf32>
    %200 = arith.addf %199, %169 : vector<8x32xf32>
    %c0_72 = arith.constant 0 : index
    %c6 = arith.constant 6 : index
    %c0_73 = arith.constant 0 : index
    %201 = vector.load %arg2[%c0_72, %c6, %c0_73] : memref<8x8x128xf32, #tpu.memory_space<vmem>>, vector<8x1x128xf32>
    %202 = vector.shape_cast %201 : vector<8x1x128xf32> to vector<8x128xf32>
    %203 = arith.truncf %200 : vector<8x32xf32> to vector<8x32xbf16>
    %cst_74 = arith.constant dense<0.000000e+00> : vector<8x128xf32>
    %204 = tpu.matmul %203, %3, %cst_74 {dimension_numbers = #tpu.dot_dimension_numbers<[1], [0], [0], [1], [0, 0, 1, 1], [], []>} : vector<8x32xbf16>, vector<32x128xbf16>, vector<8x128xf32> -> vector<8x128xf32>
    %205 = arith.addf %202, %204 : vector<8x128xf32>
    %cst_75 = arith.constant dense<0.000000e+00> : vector<8xf32>
    %206 = vector.multi_reduction <add>, %205, %cst_75 [1] : vector<8x128xf32> to vector<8xf32>
    %207 = vector.shape_cast %206 : vector<8xf32> to vector<8x1xf32>
    %cst_76 = arith.constant 1.280000e+02 : f32
    %208 = vector.broadcast %cst_76 : f32 to vector<8x1xf32>
    %209 = arith.divf %207, %208 : vector<8x1xf32>
    %210 = vector.broadcast %209 : vector<8x1xf32> to vector<8x128xf32>
    %211 = arith.subf %205, %210 : vector<8x128xf32>
    %212 = arith.mulf %211, %211 : vector<8x128xf32>
    %cst_77 = arith.constant dense<0.000000e+00> : vector<8xf32>
    %213 = vector.multi_reduction <add>, %212, %cst_77 [1] : vector<8x128xf32> to vector<8xf32>
    %214 = vector.shape_cast %213 : vector<8xf32> to vector<8x1xf32>
    %cst_78 = arith.constant 1.280000e+02 : f32
    %215 = vector.broadcast %cst_78 : f32 to vector<8x1xf32>
    %216 = arith.divf %214, %215 : vector<8x1xf32>
    %217 = vector.broadcast %209 : vector<8x1xf32> to vector<8x128xf32>
    %218 = arith.subf %205, %217 : vector<8x128xf32>
    %cst_79 = arith.constant 9.99999997E-7 : f32
    %219 = vector.broadcast %cst_79 : f32 to vector<8x1xf32>
    %220 = arith.addf %216, %219 : vector<8x1xf32>
    %221 = math.rsqrt %220 : vector<8x1xf32>
    %222 = vector.broadcast %221 : vector<8x1xf32> to vector<8x128xf32>
    %223 = arith.mulf %218, %222 : vector<8x128xf32>
    %224 = arith.mulf %223, %7 : vector<8x128xf32>
    %225 = arith.addf %224, %10 : vector<8x128xf32>
    %cst_80 = arith.constant 0.000000e+00 : f32
    %226 = vector.broadcast %cst_80 : f32 to vector<8x128xf32>
    %227 = arith.maximumf %225, %226 : vector<8x128xf32>
    %228 = arith.truncf %227 : vector<8x128xf32> to vector<8x128xbf16>
    %cst_81 = arith.constant dense<0.000000e+00> : vector<8x32xf32>
    %229 = tpu.matmul %228, %4, %cst_81 {dimension_numbers = #tpu.dot_dimension_numbers<[1], [0], [0], [1], [0, 0, 1, 1], [], []>} : vector<8x128xbf16>, vector<128x32xbf16>, vector<8x32xf32> -> vector<8x32xf32>
    %230 = arith.addf %229, %13 : vector<8x32xf32>
    %231 = arith.addf %230, %200 : vector<8x32xf32>
    %c0_82 = arith.constant 0 : index
    %c7 = arith.constant 7 : index
    %c0_83 = arith.constant 0 : index
    %232 = vector.load %arg2[%c0_82, %c7, %c0_83] : memref<8x8x128xf32, #tpu.memory_space<vmem>>, vector<8x1x128xf32>
    %233 = vector.shape_cast %232 : vector<8x1x128xf32> to vector<8x128xf32>
    %234 = arith.truncf %231 : vector<8x32xf32> to vector<8x32xbf16>
    %cst_84 = arith.constant dense<0.000000e+00> : vector<8x128xf32>
    %235 = tpu.matmul %234, %3, %cst_84 {dimension_numbers = #tpu.dot_dimension_numbers<[1], [0], [0], [1], [0, 0, 1, 1], [], []>} : vector<8x32xbf16>, vector<32x128xbf16>, vector<8x128xf32> -> vector<8x128xf32>
    %236 = arith.addf %233, %235 : vector<8x128xf32>
    %cst_85 = arith.constant dense<0.000000e+00> : vector<8xf32>
    %237 = vector.multi_reduction <add>, %236, %cst_85 [1] : vector<8x128xf32> to vector<8xf32>
    %238 = vector.shape_cast %237 : vector<8xf32> to vector<8x1xf32>
    %cst_86 = arith.constant 1.280000e+02 : f32
    %239 = vector.broadcast %cst_86 : f32 to vector<8x1xf32>
    %240 = arith.divf %238, %239 : vector<8x1xf32>
    %241 = vector.broadcast %240 : vector<8x1xf32> to vector<8x128xf32>
    %242 = arith.subf %236, %241 : vector<8x128xf32>
    %243 = arith.mulf %242, %242 : vector<8x128xf32>
    %cst_87 = arith.constant dense<0.000000e+00> : vector<8xf32>
    %244 = vector.multi_reduction <add>, %243, %cst_87 [1] : vector<8x128xf32> to vector<8xf32>
    %245 = vector.shape_cast %244 : vector<8xf32> to vector<8x1xf32>
    %cst_88 = arith.constant 1.280000e+02 : f32
    %246 = vector.broadcast %cst_88 : f32 to vector<8x1xf32>
    %247 = arith.divf %245, %246 : vector<8x1xf32>
    %248 = vector.broadcast %240 : vector<8x1xf32> to vector<8x128xf32>
    %249 = arith.subf %236, %248 : vector<8x128xf32>
    %cst_89 = arith.constant 9.99999997E-7 : f32
    %250 = vector.broadcast %cst_89 : f32 to vector<8x1xf32>
    %251 = arith.addf %247, %250 : vector<8x1xf32>
    %252 = math.rsqrt %251 : vector<8x1xf32>
    %253 = vector.broadcast %252 : vector<8x1xf32> to vector<8x128xf32>
    %254 = arith.mulf %249, %253 : vector<8x128xf32>
    %255 = arith.mulf %254, %7 : vector<8x128xf32>
    %256 = arith.addf %255, %10 : vector<8x128xf32>
    %cst_90 = arith.constant 0.000000e+00 : f32
    %257 = vector.broadcast %cst_90 : f32 to vector<8x128xf32>
    %258 = arith.maximumf %256, %257 : vector<8x128xf32>
    %259 = arith.truncf %258 : vector<8x128xf32> to vector<8x128xbf16>
    %cst_91 = arith.constant dense<0.000000e+00> : vector<8x32xf32>
    %260 = tpu.matmul %259, %4, %cst_91 {dimension_numbers = #tpu.dot_dimension_numbers<[1], [0], [0], [1], [0, 0, 1, 1], [], []>} : vector<8x128xbf16>, vector<128x32xbf16>, vector<8x32xf32> -> vector<8x32xf32>
    %261 = arith.addf %260, %13 : vector<8x32xf32>
    %262 = arith.addf %261, %231 : vector<8x32xf32>
    %c0_92 = arith.constant 0 : index
    %c0_93 = arith.constant 0 : index
    %263 = vector.load %arg9[%c0_92, %c0_93] : memref<8x32xf32, #tpu.memory_space<vmem>>, vector<8x32xf32>
    tpu.vector_store %arg9[%c0_92, %c0_93], %262 {strides = array<i32>} : memref<8x32xf32, #tpu.memory_space<vmem>>, vector<8x32xf32>,
    %264 = tpu.concatenate %45, %76, %107, %138, %169, %200, %231, %262 in 1 : vector<8x32xf32>, vector<8x32xf32>, vector<8x32xf32>, vector<8x32xf32>, vector<8x32xf32>, vector<8x32xf32>, vector<8x32xf32>, vector<8x32xf32> -> vector<8x256xf32>
    %c0_94 = arith.constant 0 : index
    %c0_95 = arith.constant 0 : index
    %c0_96 = arith.constant 0 : index
    %265 = vector.load %arg8[%c0_94, %c0_95, %c0_96] : memref<8x1x256xf32, #tpu.memory_space<vmem>>, vector<8x1x256xf32>
    %266 = vector.shape_cast %265 : vector<8x1x256xf32> to vector<8x256xf32>
    %267 = vector.shape_cast %264 : vector<8x256xf32> to vector<8x1x256xf32>
    tpu.vector_store %arg8[%c0_94, %c0_95, %c0_96], %267 {strides = array<i32>} : memref<8x1x256xf32, #tpu.memory_space<vmem>>, vector<8x1x256xf32>,
    return
  }
  func.func @transform_0(%arg0: i32) -> (i32, i32) {
    %c0_i32 = arith.constant 0 : i32
    %c0_i32_0 = arith.constant 0 : i32
    %c0_i32_1 = arith.constant 0 : i32
    return %c0_i32, %c0_i32_0 : i32, i32
  }
  func.func @transform_1(%arg0: i32) -> (i32, i32, i32) {
    %c0_i32 = arith.constant 0 : i32
    %c0_i32_0 = arith.constant 0 : i32
    %c0_i32_1 = arith.constant 0 : i32
    return %c0_i32, %arg0, %c0_i32_0 : i32, i32, i32
  }
  func.func @transform_2(%arg0: i32) -> (i32, i32) {
    %c0_i32 = arith.constant 0 : i32
    %c0_i32_0 = arith.constant 0 : i32
    %c0_i32_1 = arith.constant 0 : i32
    return %c0_i32, %c0_i32_0 : i32, i32
  }
  func.func @transform_3(%arg0: i32) -> (i32, i32) {
    %c0_i32 = arith.constant 0 : i32
    %c0_i32_0 = arith.constant 0 : i32
    %c0_i32_1 = arith.constant 0 : i32
    return %c0_i32, %c0_i32_0 : i32, i32
  }
  func.func @transform_4(%arg0: i32) -> (i32, i32) {
    %c0_i32 = arith.constant 0 : i32
    %c0_i32_0 = arith.constant 0 : i32
    %c0_i32_1 = arith.constant 0 : i32
    return %c0_i32, %c0_i32_0 : i32, i32
  }
  func.func @transform_5(%arg0: i32) -> (i32, i32) {
    %c0_i32 = arith.constant 0 : i32
    %c0_i32_0 = arith.constant 0 : i32
    %c0_i32_1 = arith.constant 0 : i32
    return %c0_i32, %c0_i32_0 : i32, i32
  }
  func.func @transform_6(%arg0: i32) -> (i32, i32) {
    %c0_i32 = arith.constant 0 : i32
    %c0_i32_0 = arith.constant 0 : i32
    %c0_i32_1 = arith.constant 0 : i32
    return %c0_i32, %c0_i32_0 : i32, i32
  }
  func.func @transform_7(%arg0: i32) -> (i32, i32, i32) {
    %c0_i32 = arith.constant 0 : i32
    %c0_i32_0 = arith.constant 0 : i32
    %c0_i32_1 = arith.constant 0 : i32
    return %c0_i32, %arg0, %c0_i32_0 : i32, i32, i32
  }
}

</mosaic_0001>

<llo_original>
// kernel: tpu_custom_call.1
$region0: #{tpu_custom_call.1}
  #allocation0 [shape = 'u32[]', space=smem, size = 0x4, offset = 0x4, fixed_abs, tag = 'smem constant byte address 0x4 - core index']
  #allocation1 [shape = 'u32[144,128]{1,0:T(1,128)}', space=vmem, size = 0x12000, scoped, tag = 'internal scratch']
  #allocation2 [shape = 'f32[8,32]{1,0:T(8,128)}', space=vmem, size = 0x1000, scoped, tag = 'scratch operand']
  %s0 = inlined_call_operand.vmem [shape: f32[1,32], index: 0, kind: input, shape index: {}]
  %s1 = inlined_call_operand.vmem [shape: f32[8,8,128], index: 1, kind: input, shape index: {}]
  %s2 = inlined_call_operand.vmem [shape: bf16[32,128], index: 2, kind: input, shape index: {}]
  %s3 = inlined_call_operand.vmem [shape: f32[1,128], index: 3, kind: input, shape index: {}]
  %s4 = inlined_call_operand.vmem [shape: f32[1,128], index: 4, kind: input, shape index: {}]
  %s5 = inlined_call_operand.vmem [shape: bf16[128,32], index: 5, kind: input, shape index: {}]
  %s6 = inlined_call_operand.vmem [shape: f32[1,32], index: 6, kind: input, shape index: {}]
  %s7 = inlined_call_operand.hbm [shape: f32[8,1,256], index: 7, kind: output, shape index: {}]
  %s8 = sld [smem:[#allocation0]]
  $region42: #{tpu_custom_call.1} parent=0
    _
  %s10 = ssub.s32 1, %s8
  %s11 = scalar_select 0, %s10, %s8
  $region1: #{tpu_custom_call.1} parent=0
    #allocation3 [shape = 'u8[8192]{0}', space=vmem, size = 0x2000, scoped, tag = 'output window, operand 0, single buffered']
    #allocation4 [shape = 's32[1]{0}', space=sflag, size = 0x4, scoped, tag = 'scoped memory for tpu_custom_call.1']
    %12 = vsyncpa [#allocation4], 0
    // Predicated region
    $region2: #{tpu_custom_call.1} parent=1 // pred_check
      _
    $region3: #{tpu_custom_call.1} parent=1 // pred_check_branch
      %14 = sbr.rel (0) target = $region5
    $region4: #{tpu_custom_call.1} parent=1 // pred_region
      _
    $region5: #{tpu_custom_call.1} parent=1 // pred_fallthru
      _
    // Predicated region
    $region6: #{tpu_custom_call.1} parent=1 // pred_check
      _
    $region7: #{tpu_custom_call.1} parent=1 // pred_check_branch
      %16 = sbr.rel (0) target = $region9
    $region8: #{tpu_custom_call.1} parent=1 // pred_region
      _
    $region9: #{tpu_custom_call.1} parent=1 // pred_fallthru
      _
    // Predicated region
    $region10: #{tpu_custom_call.1} parent=1 // pred_check
      _
    $region11: #{tpu_custom_call.1} parent=1 // pred_check_branch
      %18 = sbr.rel (0) target = $region13
    $region12: #{tpu_custom_call.1} parent=1 // pred_region
      _
    $region13: #{tpu_custom_call.1} parent=1 // pred_fallthru
      _
    // Predicated region
    $region14: #{tpu_custom_call.1} parent=1 // pred_check
      _
    $region15: #{tpu_custom_call.1} parent=1 // pred_check_branch
      %20 = sbr.rel (0) target = $region17
    $region16: #{tpu_custom_call.1} parent=1 // pred_region
      _
    $region17: #{tpu_custom_call.1} parent=1 // pred_fallthru
      _
    // Predicated region
    $region18: #{tpu_custom_call.1} parent=1 // pred_check
      _
    $region19: #{tpu_custom_call.1} parent=1 // pred_check_branch
      %22 = sbr.rel (0) target = $region21
    $region20: #{tpu_custom_call.1} parent=1 // pred_region
      _
    $region21: #{tpu_custom_call.1} parent=1 // pred_fallthru
      _
    // Predicated region
    $region22: #{tpu_custom_call.1} parent=1 // pred_check
      _
    $region23: #{tpu_custom_call.1} parent=1 // pred_check_branch
      %24 = sbr.rel (0) target = $region25
    $region24: #{tpu_custom_call.1} parent=1 // pred_region
      _
    $region25: #{tpu_custom_call.1} parent=1 // pred_fallthru
      _
    // Predicated region
    $region26: #{tpu_custom_call.1} parent=1 // pred_check
      _
    $region27: #{tpu_custom_call.1} parent=1 // pred_check_branch
      %26 = sbr.rel (0) target = $region29
    $region28: #{tpu_custom_call.1} parent=1 // pred_region
      _
    $region29: #{tpu_custom_call.1} parent=1 // pred_fallthru
      _
    %p28 = scmp.eq.s32.totalorder 0, 0
    // Predicated region
    $region30: #{tpu_custom_call.1} parent=1 // pred_check
      %p29 = pneg %p28
    $region31: #{tpu_custom_call.1} parent=1 // pred_check_branch
      %31 = sbr.rel (%p29) target = $region33
    $region32: #{tpu_custom_call.1} parent=1 // pred_region
      %v32 = vld [vmem:[%s0] sm:$0x1]
      %v34 = vlaneseq
      %v35 = vshrl.u32 %v34, 7
      %v36 = vsub.s32 0, %v35
      %v37 = vrot.slane %v32, %v36
      %vm39 = vcmask 261120
      %40 = vst.msk [vmem:[#allocation2] sm:$0xff] %vm39, %v37
    $region33: #{tpu_custom_call.1} parent=1 // pred_fallthru
      _
    %v41 = vld [vmem:[%s2] sm:$0xf]
    %v42 = vld [vmem:[%s2 + $0x4] sm:$0xf]
    %v43 = vld [vmem:[%s2 + $0x8] sm:$0xf]
    %v44 = vld [vmem:[%s2 + $0xc] sm:$0xf]
    %v45 = vld [vmem:[%s5] sm:$0xf]
    %v46 = vld [vmem:[%s5 + $0x4] sm:$0xf]
    %v47 = vld [vmem:[%s5 + $0x8] sm:$0xf]
    %v48 = vld [vmem:[%s5 + $0xc] sm:$0xf]
    %v49 = vld [vmem:[%s5 + $0x10] sm:$0xf]
    %v50 = vld [vmem:[%s5 + $0x14] sm:$0xf]
    %v51 = vld [vmem:[%s5 + $0x18] sm:$0xf]
    %v52 = vld [vmem:[%s5 + $0x1c] sm:$0xf]
    %v53 = vld [vmem:[%s5 + $0x20] sm:$0xf]
    %v54 = vld [vmem:[%s5 + $0x24] sm:$0xf]
    %v55 = vld [vmem:[%s5 + $0x28] sm:$0xf]
    %v56 = vld [vmem:[%s5 + $0x2c] sm:$0xf]
    %v57 = vld [vmem:[%s5 + $0x30] sm:$0xf]
    %v58 = vld [vmem:[%s5 + $0x34] sm:$0xf]
    %v59 = vld [vmem:[%s5 + $0x38] sm:$0xf]
    %v60 = vld [vmem:[%s5 + $0x3c] sm:$0xf]
    %v61 = vld [vmem:[%s3] sm:$0x1]
    %v63 = vlaneseq
    %v64 = vshrl.u32 %v63, 7
    %v65 = vsub.s32 0, %v64
    %v66 = vrot.slane %v61, %v65
    %v68 = vld [vmem:[%s4] sm:$0x1]
    %v70 = vlaneseq
    %v71 = vshrl.u32 %v70, 7
    %v72 = vsub.s32 0, %v71
    %v73 = vrot.slane %v68, %v72
    %v75 = vld [vmem:[%s6] sm:$0x1]
    %v77 = vlaneseq
    %v78 = vshrl.u32 %v77, 7
    %v79 = vsub.s32 0, %v78
    %v80 = vrot.slane %v75, %v79
    %v82 = vld [vmem:[#allocation2] sm:$0xff]
    %v83 = vld [vmem:[%s1] sm:$0x1]
    %v84 = vld [vmem:[%s1 + $0x8] sm:$0x1]
    %v85 = vld [vmem:[%s1 + $0x10] sm:$0x1]
    %v86 = vld [vmem:[%s1 + $0x18] sm:$0x1]
    %v87 = vld [vmem:[%s1 + $0x20] sm:$0x1]
    %v88 = vld [vmem:[%s1 + $0x28] sm:$0x1]
    %v89 = vld [vmem:[%s1 + $0x30] sm:$0x1]
    %v90 = vld [vmem:[%s1 + $0x38] sm:$0x1]
    %v91 = vpack.c.bf16 %v82, %v82
    %v96 = vunpack.c.l.b16 %v41
    %v97 = vunpack.c.l.b16 %v42
    %v98 = vunpack.c.l.b16 %v43
    %v99 = vunpack.c.l.b16 %v44
    %v100 = vpack.c.b16 %v97, %v96
    %v101 = vpack.c.b16 %v99, %v98
    %vm104 = vcmask 261120
    %v106 = vsel %vm104, %v91, 0
    %108 = vmatprep.subr.bf16.mxu0 0
    %109 = vmatpush1.bf16.msra.mxu0 0
    %110 = vmatprep.subr.bf16.mxu0 0
    %111 = vmatpush1.bf16.msra.mxu0 0
    %112 = vmatprep.subr.bf16.mxu0 0
    %113 = vmatpush1.bf16.msra.mxu0 0
    %114 = vmatprep.subr.bf16.mxu0 0
    %115 = vmatpush1.bf16.msra.mxu0 0
    %116 = vmatprep.subr.bf16.mxu0 0
    %117 = vmatpush1.bf16.msra.mxu0 0
    %118 = vmatprep.subr.bf16.mxu0 0
    %119 = vmatpush1.bf16.msra.mxu0 0
    %120 = vmatprep.subr.bf16.mxu0 0
    %121 = vmatpush1.bf16.msra.mxu0 %v101
    %122 = vmatprep.subr.bf16.mxu0 0
    %123 = vmatpush1.bf16.msra.mxu0 %v100
    %124 = vmatprep.subr.bf16.mxu0 0
    %125 = vmatpush2.bf16.msra.mxu0 0
    %126 = vmatprep.subr.bf16.mxu0 0
    %127 = vmatpush2.bf16.msra.mxu0 0
    %128 = vmatprep.subr.bf16.mxu0 0
    %129 = vmatpush2.bf16.msra.mxu0 0
    %130 = vmatprep.subr.bf16.mxu0 0
    %131 = vmatpush2.bf16.msra.mxu0 0
    %132 = vmatprep.subr.bf16.mxu0 0
    %133 = vmatpush2.bf16.msra.mxu0 0
    %134 = vmatprep.subr.bf16.mxu0 0
    %135 = vmatpush2.bf16.msra.mxu0 0
    %136 = vmatprep.subr.bf16.mxu0 0
    %137 = vmatpush2.bf16.msra.mxu0 0
    %138 = vmatprep.subr.bf16.mxu0 0
    %139 = vmatpush2.bf16.msra.mxu0 0
    %140 = vmatprep.mubr.bf16.mxu0 0
    %141 = vmatmul.mubr.bf16.gmra.mxu0 %v106
    %v142 = vpop.f32.mrf.mxu0
    %v143 = vadd.f32 0.0, %v142
    %v144 = vpop.f32.mrf.mxu0
    %v145 = vpop.f32.mrf.mxu0
    %v146 = vpop.f32.mrf.mxu0
    %147 = vdwg.mxu0
    %v149 = vrot.slane %v143, 1
    %v150 = vrot.slane %v143, 2
    %v151 = vrot.slane %v143, 3
    %v152 = vrot.slane %v143, 4
    %v153 = vrot.slane %v143, 5
    %v154 = vrot.slane %v143, 6
    %v155 = vrot.slane %v143, 7
    %v164 = vadd.f32 %v83, %v143
    %v165 = vadd.f32 %v84, %v149
    %v166 = vadd.f32 %v85, %v150
    %v167 = vadd.f32 %v86, %v151
    %v168 = vadd.f32 %v87, %v152
    %v169 = vadd.f32 %v88, %v153
    %v170 = vadd.f32 %v89, %v154
    %v171 = vadd.f32 %v90, %v155
    %v180 = vrot.slane %v165, 7
    %vm181 = vcmask 1041409
    %v182 = vsel %vm181, %v180, %v164
    %v183 = vrot.slane %v166, 6
    %vm184 = vcmask 1042434
    %v185 = vsel %vm184, %v183, %v182
    %v186 = vrot.slane %v167, 5
    %vm187 = vcmask 1043459
    %v188 = vsel %vm187, %v186, %v185
    %v189 = vrot.slane %v168, 4
    %vm190 = vcmask 1044484
    %v191 = vsel %vm190, %v189, %v188
    %v192 = vrot.slane %v169, 3
    %vm193 = vcmask 1045509
    %v194 = vsel %vm193, %v192, %v191
    %v195 = vrot.slane %v170, 2
    %vm196 = vcmask 1046534
    %v197 = vsel %vm196, %v195, %v194
    %v198 = vrot.slane %v171, 1
    %vm199 = vcmask 1047559
    %v200 = vsel %vm199, %v198, %v197
    %202 = vadd.xlane.f32.xlu0 %v200
    %v203 = vpop.xlane.xlu0 %202
    %v204 = vrcp.pop 128.0
    %v205 = vmul.f32 %v203, %v204
    %v207 = vrot.slane %v205, 1
    %v208 = vrot.slane %v205, 2
    %v209 = vrot.slane %v205, 3
    %v210 = vrot.slane %v205, 4
    %v211 = vrot.slane %v205, 5
    %v212 = vrot.slane %v205, 6
    %v213 = vrot.slane %v205, 7
    %v222 = vsub.f32 %v164, %v205
    %v223 = vsub.f32 %v165, %v207
    %v224 = vsub.f32 %v166, %v208
    %v225 = vsub.f32 %v167, %v209
    %v226 = vsub.f32 %v168, %v210
    %v227 = vsub.f32 %v169, %v211
    %v228 = vsub.f32 %v170, %v212
    %v229 = vsub.f32 %v171, %v213
    %v230 = vmul.f32 %v222, %v222
    %v231 = vmul.f32 %v223, %v223
    %v232 = vmul.f32 %v224, %v224
    %v233 = vmul.f32 %v225, %v225
    %v234 = vmul.f32 %v226, %v226
    %v235 = vmul.f32 %v227, %v227
    %v236 = vmul.f32 %v228, %v228
    %v237 = vmul.f32 %v229, %v229
    %v246 = vrot.slane %v231, 7
    %v247 = vsel %vm181, %v246, %v230
    %v248 = vrot.slane %v232, 6
    %v249 = vsel %vm184, %v248, %v247
    %v250 = vrot.slane %v233, 5
    %v251 = vsel %vm187, %v250, %v249
    %v252 = vrot.slane %v234, 4
    %v253 = vsel %vm190, %v252, %v251
    %v254 = vrot.slane %v235, 3
    %v255 = vsel %vm193, %v254, %v253
    %v256 = vrot.slane %v236, 2
    %v257 = vsel %vm196, %v256, %v255
    %v258 = vrot.slane %v237, 1
    %v259 = vsel %vm199, %v258, %v257
    %261 = vadd.xlane.f32.xlu0 %v259
    %v262 = vpop.xlane.xlu0 %261
    %v263 = vmul.f32 %v262, %v204
    %v264 = vadd.f32 %v263, 1e-06
    %v265 = vrsqrt.pop %v264
    %v267 = vrot.slane %v265, 1
    %v268 = vrot.slane %v265, 2
    %v269 = vrot.slane %v265, 3
    %v270 = vrot.slane %v265, 4
    %v271 = vrot.slane %v265, 5
    %v272 = vrot.slane %v265, 6
    %v273 = vrot.slane %v265, 7
    %v282 = vmul.f32 %v222, %v265
    %v283 = vmul.f32 %v223, %v267
    %v284 = vmul.f32 %v224, %v268
    %v285 = vmul.f32 %v225, %v269
    %v286 = vmul.f32 %v226, %v270
    %v287 = vmul.f32 %v227, %v271
    %v288 = vmul.f32 %v228, %v272
    %v289 = vmul.f32 %v229, %v273
    %v290 = vmul.f32 %v282, %v66
    %v291 = vmul.f32 %v283, %v66
    %v292 = vmul.f32 %v284, %v66
    %v293 = vmul.f32 %v285, %v66
    %v294 = vmul.f32 %v286, %v66
    %v295 = vmul.f32 %v287, %v66
    %v296 = vmul.f32 %v288, %v66
    %v297 = vmul.f32 %v289, %v66
    %v298 = vadd.f32 %v290, %v73
    %v299 = vadd.f32 %v291, %v73
    %v300 = vadd.f32 %v292, %v73
    %v301 = vadd.f32 %v293, %v73
    %v302 = vadd.f32 %v294, %v73
    %v303 = vadd.f32 %v295, %v73
    %v304 = vadd.f32 %v296, %v73
    %v305 = vadd.f32 %v297, %v73
    %v306 = vmax.f32 %v298, 0.0
    %v307 = vmax.f32 %v299, 0.0
    %v308 = vmax.f32 %v300, 0.0
    %v309 = vmax.f32 %v301, 0.0
    %v310 = vmax.f32 %v302, 0.0
    %v311 = vmax.f32 %v303, 0.0
    %v312 = vmax.f32 %v304, 0.0
    %v313 = vmax.f32 %v305, 0.0
    %v314 = vpack.c.bf16 %v306, %v306
    %v315 = vpack.c.bf16 %v307, %v307
    %v316 = vpack.c.bf16 %v308, %v308
    %v317 = vpack.c.bf16 %v309, %v309
    %v318 = vpack.c.bf16 %v310, %v310
    %v319 = vpack.c.bf16 %v311, %v311
    %v320 = vpack.c.bf16 %v312, %v312
    %v321 = vpack.c.bf16 %v313, %v313
    %v330 = vunpack.c.l.b16 %v314
    %v331 = vunpack.c.l.b16 %v315
    %v332 = vunpack.c.l.b16 %v316
    %v333 = vunpack.c.l.b16 %v317
    %v334 = vunpack.c.l.b16 %v318
    %v335 = vunpack.c.l.b16 %v319
    %v336 = vunpack.c.l.b16 %v320
    %v337 = vunpack.c.l.b16 %v321
    %v338 = vrot.slane %v331, 7
    %v339 = vsel %vm181, %v338, %v330
    %v340 = vrot.slane %v332, 6
    %v341 = vsel %vm184, %v340, %v339
    %v342 = vrot.slane %v333, 5
    %v343 = vsel %vm187, %v342, %v341
    %v344 = vrot.slane %v334, 4
    %v345 = vsel %vm190, %v344, %v343
    %v346 = vrot.slane %v335, 3
    %v347 = vsel %vm193, %v346, %v345
    %v348 = vrot.slane %v336, 2
    %v349 = vsel %vm196, %v348, %v347
    %v350 = vrot.slane %v337, 1
    %v351 = vsel %vm199, %v350, %v349
    %v352 = vpack.c.b16 %v351, %v351
    %v370 = vunpack.c.l.b16 %v45
    %v371 = vunpack.c.l.b16 %v46
    %v372 = vunpack.c.l.b16 %v47
    %v373 = vunpack.c.l.b16 %v48
    %v374 = vunpack.c.l.b16 %v49
    %v375 = vunpack.c.l.b16 %v50
    %v376 = vunpack.c.l.b16 %v51
    %v377 = vunpack.c.l.b16 %v52
    %v378 = vunpack.c.l.b16 %v53
    %v379 = vunpack.c.l.b16 %v54
    %v380 = vunpack.c.l.b16 %v55
    %v381 = vunpack.c.l.b16 %v56
    %v382 = vunpack.c.l.b16 %v57
    %v383 = vunpack.c.l.b16 %v58
    %v384 = vunpack.c.l.b16 %v59
    %v385 = vunpack.c.l.b16 %v60
    %v386 = vpack.c.b16 %v371, %v370
    %v387 = vpack.c.b16 %v373, %v372
    %v388 = vpack.c.b16 %v375, %v374
    %v389 = vpack.c.b16 %v377, %v376
    %v390 = vpack.c.b16 %v379, %v378
    %v391 = vpack.c.b16 %v381, %v380
    %v392 = vpack.c.b16 %v383, %v382
    %v393 = vpack.c.b16 %v385, %v384
    %402 = vmatprep.subr.bf16.mxu0 0
    %403 = vmatpush1.bf16.msra.mxu0 %v393
    %404 = vmatprep.subr.bf16.mxu0 0
    %405 = vmatpush1.bf16.msra.mxu0 %v392
    %406 = vmatprep.subr.bf16.mxu0 0
    %407 = vmatpush1.bf16.msra.mxu0 %v391
    %408 = vmatprep.subr.bf16.mxu0 0
    %409 = vmatpush1.bf16.msra.mxu0 %v390
    %410 = vmatprep.subr.bf16.mxu0 0
    %411 = vmatpush1.bf16.msra.mxu0 %v389
    %412 = vmatprep.subr.bf16.mxu0 0
    %413 = vmatpush1.bf16.msra.mxu0 %v388
    %414 = vmatprep.subr.bf16.mxu0 0
    %415 = vmatpush1.bf16.msra.mxu0 %v387
    %416 = vmatprep.subr.bf16.mxu0 0
    %417 = vmatpush1.bf16.msra.mxu0 %v386
    %418 = vmatprep.subr.bf16.mxu0 0
    %419 = vmatpush2.bf16.msra.mxu0 0
    %420 = vmatprep.subr.bf16.mxu0 0
    %421 = vmatpush2.bf16.msra.mxu0 0
    %422 = vmatprep.subr.bf16.mxu0 0
    %423 = vmatpush2.bf16.msra.mxu0 0
    %424 = vmatprep.subr.bf16.mxu0 0
    %425 = vmatpush2.bf16.msra.mxu0 0
    %426 = vmatprep.subr.bf16.mxu0 0
    %427 = vmatpush2.bf16.msra.mxu0 0
    %428 = vmatprep.subr.bf16.mxu0 0
    %429 = vmatpush2.bf16.msra.mxu0 0
    %430 = vmatprep.subr.bf16.mxu0 0
    %431 = vmatpush2.bf16.msra.mxu0 0
    %432 = vmatprep.subr.bf16.mxu0 0
    %433 = vmatpush2.bf16.msra.mxu0 0
    %434 = vmatprep.mubr.bf16.mxu0 0
    %435 = vmatmul.mubr.bf16.gmra.mxu0 %v352
    %v436 = vpop.f32.mrf.mxu0
    %v437 = vadd.f32 %v80, %v436
    %v438 = vpop.f32.mrf.mxu0
    %v439 = vpop.f32.mrf.mxu0
    %v440 = vpop.f32.mrf.mxu0
    %441 = vdwg.mxu0
    %v442 = vadd.f32 %v437, %v82
    %v443 = vld [vmem:[%s1 + $0x1] sm:$0x1]
    %v444 = vld [vmem:[%s1 + $0x9] sm:$0x1]
    %v445 = vld [vmem:[%s1 + $0x11] sm:$0x1]
    %v446 = vld [vmem:[%s1 + $0x19] sm:$0x1]
    %v447 = vld [vmem:[%s1 + $0x21] sm:$0x1]
    %v448 = vld [vmem:[%s1 + $0x29] sm:$0x1]
    %v449 = vld [vmem:[%s1 + $0x31] sm:$0x1]
    %v450 = vld [vmem:[%s1 + $0x39] sm:$0x1]
    %v451 = vpack.c.bf16 %v442, %v442
    %v453 = vsel %vm104, %v451, 0
    %455 = vmatprep.subr.bf16.mxu0 0
    %456 = vmatpush1.bf16.msra.mxu0 0
    %457 = vmatprep.subr.bf16.mxu0 0
    %458 = vmatpush1.bf16.msra.mxu0 0
    %459 = vmatprep.subr.bf16.mxu0 0
    %460 = vmatpush1.bf16.msra.mxu0 0
    %461 = vmatprep.subr.bf16.mxu0 0
    %462 = vmatpush1.bf16.msra.mxu0 0
    %463 = vmatprep.subr.bf16.mxu0 0
    %464 = vmatpush1.bf16.msra.mxu0 0
    %465 = vmatprep.subr.bf16.mxu0 0
    %466 = vmatpush1.bf16.msra.mxu0 0
    %467 = vmatprep.subr.bf16.mxu0 0
    %468 = vmatpush1.bf16.msra.mxu0 %v101
    %469 = vmatprep.subr.bf16.mxu0 0
    %470 = vmatpush1.bf16.msra.mxu0 %v100
    %471 = vmatprep.subr.bf16.mxu0 0
    %472 = vmatpush2.bf16.msra.mxu0 0
    %473 = vmatprep.subr.bf16.mxu0 0
    %474 = vmatpush2.bf16.msra.mxu0 0
    %475 = vmatprep.subr.bf16.mxu0 0
    %476 = vmatpush2.bf16.msra.mxu0 0
    %477 = vmatprep.subr.bf16.mxu0 0
    %478 = vmatpush2.bf16.msra.mxu0 0
    %479 = vmatprep.subr.bf16.mxu0 0
    %480 = vmatpush2.bf16.msra.mxu0 0
    %481 = vmatprep.subr.bf16.mxu0 0
    %482 = vmatpush2.bf16.msra.mxu0 0
    %483 = vmatprep.subr.bf16.mxu0 0
    %484 = vmatpush2.bf16.msra.mxu0 0
    %485 = vmatprep.subr.bf16.mxu0 0
    %486 = vmatpush2.bf16.msra.mxu0 0
    %487 = vmatprep.mubr.bf16.mxu0 0
    %488 = vmatmul.mubr.bf16.gmra.mxu0 %v453
    %v489 = vpop.f32.mrf.mxu0
    %v490 = vadd.f32 0.0, %v489
    %v491 = vpop.f32.mrf.mxu0
    %v492 = vpop.f32.mrf.mxu0
    %v493 = vpop.f32.mrf.mxu0
    %494 = vdwg.mxu0
    %v496 = vrot.slane %v490, 1
    %v497 = vrot.slane %v490, 2
    %v498 = vrot.slane %v490, 3
    %v499 = vrot.slane %v490, 4
    %v500 = vrot.slane %v490, 5
    %v501 = vrot.slane %v490, 6
    %v502 = vrot.slane %v490, 7
    %v511 = vadd.f32 %v443, %v490
    %v512 = vadd.f32 %v444, %v496
    %v513 = vadd.f32 %v445, %v497
    %v514 = vadd.f32 %v446, %v498
    %v515 = vadd.f32 %v447, %v499
    %v516 = vadd.f32 %v448, %v500
    %v517 = vadd.f32 %v449, %v501
    %v518 = vadd.f32 %v450, %v502
    %v527 = vrot.slane %v512, 7
    %v528 = vsel %vm181, %v527, %v511
    %v529 = vrot.slane %v513, 6
    %v530 = vsel %vm184, %v529, %v528
    %v531 = vrot.slane %v514, 5
    %v532 = vsel %vm187, %v531, %v530
    %v533 = vrot.slane %v515, 4
    %v534 = vsel %vm190, %v533, %v532
    %v535 = vrot.slane %v516, 3
    %v536 = vsel %vm193, %v535, %v534
    %v537 = vrot.slane %v517, 2
    %v538 = vsel %vm196, %v537, %v536
    %v539 = vrot.slane %v518, 1
    %v540 = vsel %vm199, %v539, %v538
    %542 = vadd.xlane.f32.xlu0 %v540
    %v543 = vpop.xlane.xlu0 %542
    %v544 = vmul.f32 %v543, %v204
    %v546 = vrot.slane %v544, 1
    %v547 = vrot.slane %v544, 2
    %v548 = vrot.slane %v544, 3
    %v549 = vrot.slane %v544, 4
    %v550 = vrot.slane %v544, 5
    %v551 = vrot.slane %v544, 6
    %v552 = vrot.slane %v544, 7
    %v561 = vsub.f32 %v511, %v544
    %v562 = vsub.f32 %v512, %v546
    %v563 = vsub.f32 %v513, %v547
    %v564 = vsub.f32 %v514, %v548
    %v565 = vsub.f32 %v515, %v549
    %v566 = vsub.f32 %v516, %v550
    %v567 = vsub.f32 %v517, %v551
    %v568 = vsub.f32 %v518, %v552
    %v569 = vmul.f32 %v561, %v561
    %v570 = vmul.f32 %v562, %v562
    %v571 = vmul.f32 %v563, %v563
    %v572 = vmul.f32 %v564, %v564
    %v573 = vmul.f32 %v565, %v565
    %v574 = vmul.f32 %v566, %v566
    %v575 = vmul.f32 %v567, %v567
    %v576 = vmul.f32 %v568, %v568
    %v585 = vrot.slane %v570, 7
    %v586 = vsel %vm181, %v585, %v569
    %v587 = vrot.slane %v571, 6
    %v588 = vsel %vm184, %v587, %v586
    %v589 = vrot.slane %v572, 5
    %v590 = vsel %vm187, %v589, %v588
    %v591 = vrot.slane %v573, 4
    %v592 = vsel %vm190, %v591, %v590
    %v593 = vrot.slane %v574, 3
    %v594 = vsel %vm193, %v593, %v592
    %v595 = vrot.slane %v575, 2
    %v596 = vsel %vm196, %v595, %v594
    %v597 = vrot.slane %v576, 1
    %v598 = vsel %vm199, %v597, %v596
    %600 = vadd.xlane.f32.xlu0 %v598
    %v601 = vpop.xlane.xlu0 %600
    %v602 = vmul.f32 %v601, %v204
    %v603 = vadd.f32 %v602, 1e-06
    %v604 = vrsqrt.pop %v603
    %v606 = vrot.slane %v604, 1
    %v607 = vrot.slane %v604, 2
    %v608 = vrot.slane %v604, 3
    %v609 = vrot.slane %v604, 4
    %v610 = vrot.slane %v604, 5
    %v611 = vrot.slane %v604, 6
    %v612 = vrot.slane %v604, 7
    %v621 = vmul.f32 %v561, %v604
    %v622 = vmul.f32 %v562, %v606
    %v623 = vmul.f32 %v563, %v607
    %v624 = vmul.f32 %v564, %v608
    %v625 = vmul.f32 %v565, %v609
    %v626 = vmul.f32 %v566, %v610
    %v627 = vmul.f32 %v567, %v611
    %v628 = vmul.f32 %v568, %v612
    %v629 = vmul.f32 %v621, %v66
    %v630 = vmul.f32 %v622, %v66
    %v631 = vmul.f32 %v623, %v66
    %v632 = vmul.f32 %v624, %v66
    %v633 = vmul.f32 %v625, %v66
    %v634 = vmul.f32 %v626, %v66
    %v635 = vmul.f32 %v627, %v66
    %v636 = vmul.f32 %v628, %v66
    %v637 = vadd.f32 %v629, %v73
    %v638 = vadd.f32 %v630, %v73
    %v639 = vadd.f32 %v631, %v73
    %v640 = vadd.f32 %v632, %v73
    %v641 = vadd.f32 %v633, %v73
    %v642 = vadd.f32 %v634, %v73
    %v643 = vadd.f32 %v635, %v73
    %v644 = vadd.f32 %v636, %v73
    %v645 = vmax.f32 %v637, 0.0
    %v646 = vmax.f32 %v638, 0.0
    %v647 = vmax.f32 %v639, 0.0
    %v648 = vmax.f32 %v640, 0.0
    %v649 = vmax.f32 %v641, 0.0
    %v650 = vmax.f32 %v642, 0.0
    %v651 = vmax.f32 %v643, 0.0
    %v652 = vmax.f32 %v644, 0.0
    %v653 = vpack.c.bf16 %v645, %v645
    %v654 = vpack.c.bf16 %v646, %v646
    %v655 = vpack.c.bf16 %v647, %v647
    %v656 = vpack.c.bf16 %v648, %v648
    %v657 = vpack.c.bf16 %v649, %v649
    %v658 = vpack.c.bf16 %v650, %v650
    %v659 = vpack.c.bf16 %v651, %v651
    %v660 = vpack.c.bf16 %v652, %v652
    %v669 = vunpack.c.l.b16 %v653
    %v670 = vunpack.c.l.b16 %v654
    %v671 = vunpack.c.l.b16 %v655
    %v672 = vunpack.c.l.b16 %v656
    %v673 = vunpack.c.l.b16 %v657
    %v674 = vunpack.c.l.b16 %v658
    %v675 = vunpack.c.l.b16 %v659
    %v676 = vunpack.c.l.b16 %v660
    %v677 = vrot.slane %v670, 7
    %v678 = vsel %vm181, %v677, %v669
    %v679 = vrot.slane %v671, 6
    %v680 = vsel %vm184, %v679, %v678
    %v681 = vrot.slane %v672, 5
    %v682 = vsel %vm187, %v681, %v680
    %v683 = vrot.slane %v673, 4
    %v684 = vsel %vm190, %v683, %v682
    %v685 = vrot.slane %v674, 3
    %v686 = vsel %vm193, %v685, %v684
    %v687 = vrot.slane %v675, 2
    %v688 = vsel %vm196, %v687, %v686
    %v689 = vrot.slane %v676, 1
    %v690 = vsel %vm199, %v689, %v688
    %v691 = vpack.c.b16 %v690, %v690
    %693 = vmatprep.subr.bf16.mxu0 0
    %694 = vmatpush1.bf16.msra.mxu0 %v393
    %695 = vmatprep.subr.bf16.mxu0 0
    %696 = vmatpush1.bf16.msra.mxu0 %v392
    %697 = vmatprep.subr.bf16.mxu0 0
    %698 = vmatpush1.bf16.msra.mxu0 %v391
    %699 = vmatprep.subr.bf16.mxu0 0
    %700 = vmatpush1.bf16.msra.mxu0 %v390
    %701 = vmatprep.subr.bf16.mxu0 0
    %702 = vmatpush1.bf16.msra.mxu0 %v389
    %703 = vmatprep.subr.bf16.mxu0 0
    %704 = vmatpush1.bf16.msra.mxu0 %v388
    %705 = vmatprep.subr.bf16.mxu0 0
    %706 = vmatpush1.bf16.msra.mxu0 %v387
    %707 = vmatprep.subr.bf16.mxu0 0
    %708 = vmatpush1.bf16.msra.mxu0 %v386
    %709 = vmatprep.subr.bf16.mxu0 0
    %710 = vmatpush2.bf16.msra.mxu0 0
    %711 = vmatprep.subr.bf16.mxu0 0
    %712 = vmatpush2.bf16.msra.mxu0 0
    %713 = vmatprep.subr.bf16.mxu0 0
    %714 = vmatpush2.bf16.msra.mxu0 0
    %715 = vmatprep.subr.bf16.mxu0 0
    %716 = vmatpush2.bf16.msra.mxu0 0
    %717 = vmatprep.subr.bf16.mxu0 0
    %718 = vmatpush2.bf16.msra.mxu0 0
    %719 = vmatprep.subr.bf16.mxu0 0
    %720 = vmatpush2.bf16.msra.mxu0 0
    %721 = vmatprep.subr.bf16.mxu0 0
    %722 = vmatpush2.bf16.msra.mxu0 0
    %723 = vmatprep.subr.bf16.mxu0 0
    %724 = vmatpush2.bf16.msra.mxu0 0
    %725 = vmatprep.mubr.bf16.mxu0 0
    %726 = vmatmul.mubr.bf16.gmra.mxu0 %v691
    %v727 = vpop.f32.mrf.mxu0
    %v728 = vadd.f32 %v80, %v727
    %v729 = vpop.f32.mrf.mxu0
    %v730 = vpop.f32.mrf.mxu0
    %v731 = vpop.f32.mrf.mxu0
    %732 = vdwg.mxu0
    %v733 = vadd.f32 %v728, %v442
    %v734 = vld [vmem:[%s1 + $0x2] sm:$0x1]
    %v735 = vld [vmem:[%s1 + $0xa] sm:$0x1]
    %v736 = vld [vmem:[%s1 + $0x12] sm:$0x1]
    %v737 = vld [vmem:[%s1 + $0x1a] sm:$0x1]
    %v738 = vld [vmem:[%s1 + $0x22] sm:$0x1]
    %v739 = vld [vmem:[%s1 + $0x2a] sm:$0x1]
    %v740 = vld [vmem:[%s1 + $0x32] sm:$0x1]
    %v741 = vld [vmem:[%s1 + $0x3a] sm:$0x1]
    %v742 = vpack.c.bf16 %v733, %v733
    %v744 = vsel %vm104, %v742, 0
    %746 = vmatprep.subr.bf16.mxu0 0
    %747 = vmatpush1.bf16.msra.mxu0 0
    %748 = vmatprep.subr.bf16.mxu0 0
    %749 = vmatpush1.bf16.msra.mxu0 0
    %750 = vmatprep.subr.bf16.mxu0 0
    %751 = vmatpush1.bf16.msra.mxu0 0
    %752 = vmatprep.subr.bf16.mxu0 0
    %753 = vmatpush1.bf16.msra.mxu0 0
    %754 = vmatprep.subr.bf16.mxu0 0
    %755 = vmatpush1.bf16.msra.mxu0 0
    %756 = vmatprep.subr.bf16.mxu0 0
    %757 = vmatpush1.bf16.msra.mxu0 0
    %758 = vmatprep.subr.bf16.mxu0 0
    %759 = vmatpush1.bf16.msra.mxu0 %v101
    %760 = vmatprep.subr.bf16.mxu0 0
    %761 = vmatpush1.bf16.msra.mxu0 %v100
    %762 = vmatprep.subr.bf16.mxu0 0
    %763 = vmatpush2.bf16.msra.mxu0 0
    %764 = vmatprep.subr.bf16.mxu0 0
    %765 = vmatpush2.bf16.msra.mxu0 0
    %766 = vmatprep.subr.bf16.mxu0 0
    %767 = vmatpush2.bf16.msra.mxu0 0
    %768 = vmatprep.subr.bf16.mxu0 0
    %769 = vmatpush2.bf16.msra.mxu0 0
    %770 = vmatprep.subr.bf16.mxu0 0
    %771 = vmatpush2.bf16.msra.mxu0 0
    %772 = vmatprep.subr.bf16.mxu0 0
    %773 = vmatpush2.bf16.msra.mxu0 0
    %774 = vmatprep.subr.bf16.mxu0 0
    %775 = vmatpush2.bf16.msra.mxu0 0
    %776 = vmatprep.subr.bf16.mxu0 0
    %777 = vmatpush2.bf16.msra.mxu0 0
    %778 = vmatprep.mubr.bf16.mxu0 0
    %779 = vmatmul.mubr.bf16.gmra.mxu0 %v744
    %v780 = vpop.f32.mrf.mxu0
    %v781 = vadd.f32 0.0, %v780
    %v782 = vpop.f32.mrf.mxu0
    %v783 = vpop.f32.mrf.mxu0
    %v784 = vpop.f32.mrf.mxu0
    %785 = vdwg.mxu0
    %v787 = vrot.slane %v781, 1
    %v788 = vrot.slane %v781, 2
    %v789 = vrot.slane %v781, 3
    %v790 = vrot.slane %v781, 4
    %v791 = vrot.slane %v781, 5
    %v792 = vrot.slane %v781, 6
    %v793 = vrot.slane %v781, 7
    %v802 = vadd.f32 %v734, %v781
    %v803 = vadd.f32 %v735, %v787
    %v804 = vadd.f32 %v736, %v788
    %v805 = vadd.f32 %v737, %v789
    %v806 = vadd.f32 %v738, %v790
    %v807 = vadd.f32 %v739, %v791
    %v808 = vadd.f32 %v740, %v792
    %v809 = vadd.f32 %v741, %v793
    %v818 = vrot.slane %v803, 7
    %v819 = vsel %vm181, %v818, %v802
    %v820 = vrot.slane %v804, 6
    %v821 = vsel %vm184, %v820, %v819
    %v822 = vrot.slane %v805, 5
    %v823 = vsel %vm187, %v822, %v821
    %v824 = vrot.slane %v806, 4
    %v825 = vsel %vm190, %v824, %v823
    %v826 = vrot.slane %v807, 3
    %v827 = vsel %vm193, %v826, %v825
    %v828 = vrot.slane %v808, 2
    %v829 = vsel %vm196, %v828, %v827
    %v830 = vrot.slane %v809, 1
    %v831 = vsel %vm199, %v830, %v829
    %833 = vadd.xlane.f32.xlu0 %v831
    %v834 = vpop.xlane.xlu0 %833
    %v835 = vmul.f32 %v834, %v204
    %v837 = vrot.slane %v835, 1
    %v838 = vrot.slane %v835, 2
    %v839 = vrot.slane %v835, 3
    %v840 = vrot.slane %v835, 4
    %v841 = vrot.slane %v835, 5
    %v842 = vrot.slane %v835, 6
    %v843 = vrot.slane %v835, 7
    %v852 = vsub.f32 %v802, %v835
    %v853 = vsub.f32 %v803, %v837
    %v854 = vsub.f32 %v804, %v838
    %v855 = vsub.f32 %v805, %v839
    %v856 = vsub.f32 %v806, %v840
    %v857 = vsub.f32 %v807, %v841
    %v858 = vsub.f32 %v808, %v842
    %v859 = vsub.f32 %v809, %v843
    %v860 = vmul.f32 %v852, %v852
    %v861 = vmul.f32 %v853, %v853
    %v862 = vmul.f32 %v854, %v854
    %v863 = vmul.f32 %v855, %v855
    %v864 = vmul.f32 %v856, %v856
    %v865 = vmul.f32 %v857, %v857
    %v866 = vmul.f32 %v858, %v858
    %v867 = vmul.f32 %v859, %v859
    %v876 = vrot.slane %v861, 7
    %v877 = vsel %vm181, %v876, %v860
    %v878 = vrot.slane %v862, 6
    %v879 = vsel %vm184, %v878, %v877
    %v880 = vrot.slane %v863, 5
    %v881 = vsel %vm187, %v880, %v879
    %v882 = vrot.slane %v864, 4
    %v883 = vsel %vm190, %v882, %v881
    %v884 = vrot.slane %v865, 3
    %v885 = vsel %vm193, %v884, %v883
    %v886 = vrot.slane %v866, 2
    %v887 = vsel %vm196, %v886, %v885
    %v888 = vrot.slane %v867, 1
    %v889 = vsel %vm199, %v888, %v887
    %891 = vadd.xlane.f32.xlu0 %v889
    %v892 = vpop.xlane.xlu0 %891
    %v893 = vmul.f32 %v892, %v204
    %v894 = vadd.f32 %v893, 1e-06
    %v895 = vrsqrt.pop %v894
    %v897 = vrot.slane %v895, 1
    %v898 = vrot.slane %v895, 2
    %v899 = vrot.slane %v895, 3
    %v900 = vrot.slane %v895, 4
    %v901 = vrot.slane %v895, 5
    %v902 = vrot.slane %v895, 6
    %v903 = vrot.slane %v895, 7
    %v912 = vmul.f32 %v852, %v895
    %v913 = vmul.f32 %v853, %v897
    %v914 = vmul.f32 %v854, %v898
    %v915 = vmul.f32 %v855, %v899
    %v916 = vmul.f32 %v856, %v900
    %v917 = vmul.f32 %v857, %v901
    %v918 = vmul.f32 %v858, %v902
    %v919 = vmul.f32 %v859, %v903
    %v920 = vmul.f32 %v912, %v66
    %v921 = vmul.f32 %v913, %v66
    %v922 = vmul.f32 %v914, %v66
    %v923 = vmul.f32 %v915, %v66
    %v924 = vmul.f32 %v916, %v66
    %v925 = vmul.f32 %v917, %v66
    %v926 = vmul.f32 %v918, %v66
    %v927 = vmul.f32 %v919, %v66
    %v928 = vadd.f32 %v920, %v73
    %v929 = vadd.f32 %v921, %v73
    %v930 = vadd.f32 %v922, %v73
    %v931 = vadd.f32 %v923, %v73
    %v932 = vadd.f32 %v924, %v73
    %v933 = vadd.f32 %v925, %v73
    %v934 = vadd.f32 %v926, %v73
    %v935 = vadd.f32 %v927, %v73
    %v936 = vmax.f32 %v928, 0.0
    %v937 = vmax.f32 %v929, 0.0
    %v938 = vmax.f32 %v930, 0.0
    %v939 = vmax.f32 %v931, 0.0
    %v940 = vmax.f32 %v932, 0.0
    %v941 = vmax.f32 %v933, 0.0
    %v942 = vmax.f32 %v934, 0.0
    %v943 = vmax.f32 %v935, 0.0
    %v944 = vpack.c.bf16 %v936, %v936
    %v945 = vpack.c.bf16 %v937, %v937
    %v946 = vpack.c.bf16 %v938, %v938
    %v947 = vpack.c.bf16 %v939, %v939
    %v948 = vpack.c.bf16 %v940, %v940
    %v949 = vpack.c.bf16 %v941, %v941
    %v950 = vpack.c.bf16 %v942, %v942
    %v951 = vpack.c.bf16 %v943, %v943
    %v960 = vunpack.c.l.b16 %v944
    %v961 = vunpack.c.l.b16 %v945
    %v962 = vunpack.c.l.b16 %v946
    %v963 = vunpack.c.l.b16 %v947
    %v964 = vunpack.c.l.b16 %v948
    %v965 = vunpack.c.l.b16 %v949
    %v966 = vunpack.c.l.b16 %v950
    %v967 = vunpack.c.l.b16 %v951
    %v968 = vrot.slane %v961, 7
    %v969 = vsel %vm181, %v968, %v960
    %v970 = vrot.slane %v962, 6
    %v971 = vsel %vm184, %v970, %v969
    %v972 = vrot.slane %v963, 5
    %v973 = vsel %vm187, %v972, %v971
    %v974 = vrot.slane %v964, 4
    %v975 = vsel %vm190, %v974, %v973
    %v976 = vrot.slane %v965, 3
    %v977 = vsel %vm193, %v976, %v975
    %v978 = vrot.slane %v966, 2
    %v979 = vsel %vm196, %v978, %v977
    %v980 = vrot.slane %v967, 1
    %v981 = vsel %vm199, %v980, %v979
    %v982 = vpack.c.b16 %v981, %v981
    %984 = vmatprep.subr.bf16.mxu0 0
    %985 = vmatpush1.bf16.msra.mxu0 %v393
    %986 = vmatprep.subr.bf16.mxu0 0
    %987 = vmatpush1.bf16.msra.mxu0 %v392
    %988 = vmatprep.subr.bf16.mxu0 0
    %989 = vmatpush1.bf16.msra.mxu0 %v391
    %990 = vmatprep.subr.bf16.mxu0 0
    %991 = vmatpush1.bf16.msra.mxu0 %v390
    %992 = vmatprep.subr.bf16.mxu0 0
    %993 = vmatpush1.bf16.msra.mxu0 %v389
    %994 = vmatprep.subr.bf16.mxu0 0
    %995 = vmatpush1.bf16.msra.mxu0 %v388
    %996 = vmatprep.subr.bf16.mxu0 0
    %997 = vmatpush1.bf16.msra.mxu0 %v387
    %998 = vmatprep.subr.bf16.mxu0 0
    %999 = vmatpush1.bf16.msra.mxu0 %v386
    %1000 = vmatprep.subr.bf16.mxu0 0
    %1001 = vmatpush2.bf16.msra.mxu0 0
    %1002 = vmatprep.subr.bf16.mxu0 0
    %1003 = vmatpush2.bf16.msra.mxu0 0
    %1004 = vmatprep.subr.bf16.mxu0 0
    %1005 = vmatpush2.bf16.msra.mxu0 0
    %1006 = vmatprep.subr.bf16.mxu0 0
    %1007 = vmatpush2.bf16.msra.mxu0 0
    %1008 = vmatprep.subr.bf16.mxu0 0
    %1009 = vmatpush2.bf16.msra.mxu0 0
    %1010 = vmatprep.subr.bf16.mxu0 0
    %1011 = vmatpush2.bf16.msra.mxu0 0
    %1012 = vmatprep.subr.bf16.mxu0 0
    %1013 = vmatpush2.bf16.msra.mxu0 0
    %1014 = vmatprep.subr.bf16.mxu0 0
    %1015 = vmatpush2.bf16.msra.mxu0 0
    %1016 = vmatprep.mubr.bf16.mxu0 0
    %1017 = vmatmul.mubr.bf16.gmra.mxu0 %v982
    %v1018 = vpop.f32.mrf.mxu0
    %v1019 = vadd.f32 %v80, %v1018
    %v1020 = vpop.f32.mrf.mxu0
    %v1021 = vpop.f32.mrf.mxu0
    %v1022 = vpop.f32.mrf.mxu0
    %1023 = vdwg.mxu0
    %v1024 = vadd.f32 %v1019, %v733
    %v1025 = vld [vmem:[%s1 + $0x3] sm:$0x1]
    %v1026 = vld [vmem:[%s1 + $0xb] sm:$0x1]
    %v1027 = vld [vmem:[%s1 + $0x13] sm:$0x1]
    %v1028 = vld [vmem:[%s1 + $0x1b] sm:$0x1]
    %v1029 = vld [vmem:[%s1 + $0x23] sm:$0x1]
    %v1030 = vld [vmem:[%s1 + $0x2b] sm:$0x1]
    %v1031 = vld [vmem:[%s1 + $0x33] sm:$0x1]
    %v1032 = vld [vmem:[%s1 + $0x3b] sm:$0x1]
    %v1033 = vpack.c.bf16 %v1024, %v1024
    %v1035 = vsel %vm104, %v1033, 0
    %1037 = vmatprep.subr.bf16.mxu0 0
    %1038 = vmatpush1.bf16.msra.mxu0 0
    %1039 = vmatprep.subr.bf16.mxu0 0
    %1040 = vmatpush1.bf16.msra.mxu0 0
    %1041 = vmatprep.subr.bf16.mxu0 0
    %1042 = vmatpush1.bf16.msra.mxu0 0
    %1043 = vmatprep.subr.bf16.mxu0 0
    %1044 = vmatpush1.bf16.msra.mxu0 0
    %1045 = vmatprep.subr.bf16.mxu0 0
    %1046 = vmatpush1.bf16.msra.mxu0 0
    %1047 = vmatprep.subr.bf16.mxu0 0
    %1048 = vmatpush1.bf16.msra.mxu0 0
    %1049 = vmatprep.subr.bf16.mxu0 0
    %1050 = vmatpush1.bf16.msra.mxu0 %v101
    %1051 = vmatprep.subr.bf16.mxu0 0
    %1052 = vmatpush1.bf16.msra.mxu0 %v100
    %1053 = vmatprep.subr.bf16.mxu0 0
    %1054 = vmatpush2.bf16.msra.mxu0 0
    %1055 = vmatprep.subr.bf16.mxu0 0
    %1056 = vmatpush2.bf16.msra.mxu0 0
    %1057 = vmatprep.subr.bf16.mxu0 0
    %1058 = vmatpush2.bf16.msra.mxu0 0
    %1059 = vmatprep.subr.bf16.mxu0 0
    %1060 = vmatpush2.bf16.msra.mxu0 0
    %1061 = vmatprep.subr.bf16.mxu0 0
    %1062 = vmatpush2.bf16.msra.mxu0 0
    %1063 = vmatprep.subr.bf16.mxu0 0
    %1064 = vmatpush2.bf16.msra.mxu0 0
    %1065 = vmatprep.subr.bf16.mxu0 0
    %1066 = vmatpush2.bf16.msra.mxu0 0
    %1067 = vmatprep.subr.bf16.mxu0 0
    %1068 = vmatpush2.bf16.msra.mxu0 0
    %1069 = vmatprep.mubr.bf16.mxu0 0
    %1070 = vmatmul.mubr.bf16.gmra.mxu0 %v1035
    %v1071 = vpop.f32.mrf.mxu0
    %v1072 = vadd.f32 0.0, %v1071
    %v1073 = vpop.f32.mrf.mxu0
    %v1074 = vpop.f32.mrf.mxu0
    %v1075 = vpop.f32.mrf.mxu0
    %1076 = vdwg.mxu0
    %v1078 = vrot.slane %v1072, 1
    %v1079 = vrot.slane %v1072, 2
    %v1080 = vrot.slane %v1072, 3
    %v1081 = vrot.slane %v1072, 4
    %v1082 = vrot.slane %v1072, 5
    %v1083 = vrot.slane %v1072, 6
    %v1084 = vrot.slane %v1072, 7
    %v1093 = vadd.f32 %v1025, %v1072
    %v1094 = vadd.f32 %v1026, %v1078
    %v1095 = vadd.f32 %v1027, %v1079
    %v1096 = vadd.f32 %v1028, %v1080
    %v1097 = vadd.f32 %v1029, %v1081
    %v1098 = vadd.f32 %v1030, %v1082
    %v1099 = vadd.f32 %v1031, %v1083
    %v1100 = vadd.f32 %v1032, %v1084
    %v1109 = vrot.slane %v1094, 7
    %v1110 = vsel %vm181, %v1109, %v1093
    %v1111 = vrot.slane %v1095, 6
    %v1112 = vsel %vm184, %v1111, %v1110
    %v1113 = vrot.slane %v1096, 5
    %v1114 = vsel %vm187, %v1113, %v1112
    %v1115 = vrot.slane %v1097, 4
    %v1116 = vsel %vm190, %v1115, %v1114
    %v1117 = vrot.slane %v1098, 3
    %v1118 = vsel %vm193, %v1117, %v1116
    %v1119 = vrot.slane %v1099, 2
    %v1120 = vsel %vm196, %v1119, %v1118
    %v1121 = vrot.slane %v1100, 1
    %v1122 = vsel %vm199, %v1121, %v1120
    %1124 = vadd.xlane.f32.xlu0 %v1122
    %v1125 = vpop.xlane.xlu0 %1124
    %v1126 = vmul.f32 %v1125, %v204
    %v1128 = vrot.slane %v1126, 1
    %v1129 = vrot.slane %v1126, 2
    %v1130 = vrot.slane %v1126, 3
    %v1131 = vrot.slane %v1126, 4
    %v1132 = vrot.slane %v1126, 5
    %v1133 = vrot.slane %v1126, 6
    %v1134 = vrot.slane %v1126, 7
    %v1143 = vsub.f32 %v1093, %v1126
    %v1144 = vsub.f32 %v1094, %v1128
    %v1145 = vsub.f32 %v1095, %v1129
    %v1146 = vsub.f32 %v1096, %v1130
    %v1147 = vsub.f32 %v1097, %v1131
    %v1148 = vsub.f32 %v1098, %v1132
    %v1149 = vsub.f32 %v1099, %v1133
    %v1150 = vsub.f32 %v1100, %v1134
    %v1151 = vmul.f32 %v1143, %v1143
    %v1152 = vmul.f32 %v1144, %v1144
    %v1153 = vmul.f32 %v1145, %v1145
    %v1154 = vmul.f32 %v1146, %v1146
    %v1155 = vmul.f32 %v1147, %v1147
    %v1156 = vmul.f32 %v1148, %v1148
    %v1157 = vmul.f32 %v1149, %v1149
    %v1158 = vmul.f32 %v1150, %v1150
    %v1167 = vrot.slane %v1152, 7
    %v1168 = vsel %vm181, %v1167, %v1151
    %v1169 = vrot.slane %v1153, 6
    %v1170 = vsel %vm184, %v1169, %v1168
    %v1171 = vrot.slane %v1154, 5
    %v1172 = vsel %vm187, %v1171, %v1170
    %v1173 = vrot.slane %v1155, 4
    %v1174 = vsel %vm190, %v1173, %v1172
    %v1175 = vrot.slane %v1156, 3
    %v1176 = vsel %vm193, %v1175, %v1174
    %v1177 = vrot.slane %v1157, 2
    %v1178 = vsel %vm196, %v1177, %v1176
    %v1179 = vrot.slane %v1158, 1
    %v1180 = vsel %vm199, %v1179, %v1178
    %1182 = vadd.xlane.f32.xlu0 %v1180
    %v1183 = vpop.xlane.xlu0 %1182
    %v1184 = vmul.f32 %v1183, %v204
    %v1185 = vadd.f32 %v1184, 1e-06
    %v1186 = vrsqrt.pop %v1185
    %v1188 = vrot.slane %v1186, 1
    %v1189 = vrot.slane %v1186, 2
    %v1190 = vrot.slane %v1186, 3
    %v1191 = vrot.slane %v1186, 4
    %v1192 = vrot.slane %v1186, 5
    %v1193 = vrot.slane %v1186, 6
    %v1194 = vrot.slane %v1186, 7
    %v1203 = vmul.f32 %v1143, %v1186
    %v1204 = vmul.f32 %v1144, %v1188
    %v1205 = vmul.f32 %v1145, %v1189
    %v1206 = vmul.f32 %v1146, %v1190
    %v1207 = vmul.f32 %v1147, %v1191
    %v1208 = vmul.f32 %v1148, %v1192
    %v1209 = vmul.f32 %v1149, %v1193
    %v1210 = vmul.f32 %v1150, %v1194
    %v1211 = vmul.f32 %v1203, %v66
    %v1212 = vmul.f32 %v1204, %v66
    %v1213 = vmul.f32 %v1205, %v66
    %v1214 = vmul.f32 %v1206, %v66
    %v1215 = vmul.f32 %v1207, %v66
    %v1216 = vmul.f32 %v1208, %v66
    %v1217 = vmul.f32 %v1209, %v66
    %v1218 = vmul.f32 %v1210, %v66
    %v1219 = vadd.f32 %v1211, %v73
    %v1220 = vadd.f32 %v1212, %v73
    %v1221 = vadd.f32 %v1213, %v73
    %v1222 = vadd.f32 %v1214, %v73
    %v1223 = vadd.f32 %v1215, %v73
    %v1224 = vadd.f32 %v1216, %v73
    %v1225 = vadd.f32 %v1217, %v73
    %v1226 = vadd.f32 %v1218, %v73
    %v1227 = vmax.f32 %v1219, 0.0
    %v1228 = vmax.f32 %v1220, 0.0
    %v1229 = vmax.f32 %v1221, 0.0
    %v1230 = vmax.f32 %v1222, 0.0
    %v1231 = vmax.f32 %v1223, 0.0
    %v1232 = vmax.f32 %v1224, 0.0
    %v1233 = vmax.f32 %v1225, 0.0
    %v1234 = vmax.f32 %v1226, 0.0
    %v1235 = vpack.c.bf16 %v1227, %v1227
    %v1236 = vpack.c.bf16 %v1228, %v1228
    %v1237 = vpack.c.bf16 %v1229, %v1229
    %v1238 = vpack.c.bf16 %v1230, %v1230
    %v1239 = vpack.c.bf16 %v1231, %v1231
    %v1240 = vpack.c.bf16 %v1232, %v1232
    %v1241 = vpack.c.bf16 %v1233, %v1233
    %v1242 = vpack.c.bf16 %v1234, %v1234
    %v1251 = vunpack.c.l.b16 %v1235
    %v1252 = vunpack.c.l.b16 %v1236
    %v1253 = vunpack.c.l.b16 %v1237
    %v1254 = vunpack.c.l.b16 %v1238
    %v1255 = vunpack.c.l.b16 %v1239
    %v1256 = vunpack.c.l.b16 %v1240
    %v1257 = vunpack.c.l.b16 %v1241
    %v1258 = vunpack.c.l.b16 %v1242
    %v1259 = vrot.slane %v1252, 7
    %v1260 = vsel %vm181, %v1259, %v1251
    %v1261 = vrot.slane %v1253, 6
    %v1262 = vsel %vm184, %v1261, %v1260
    %v1263 = vrot.slane %v1254, 5
    %v1264 = vsel %vm187, %v1263, %v1262
    %v1265 = vrot.slane %v1255, 4
    %v1266 = vsel %vm190, %v1265, %v1264
    %v1267 = vrot.slane %v1256, 3
    %v1268 = vsel %vm193, %v1267, %v1266
    %v1269 = vrot.slane %v1257, 2
    %v1270 = vsel %vm196, %v1269, %v1268
    %v1271 = vrot.slane %v1258, 1
    %v1272 = vsel %vm199, %v1271, %v1270
    %v1273 = vpack.c.b16 %v1272, %v1272
    %1275 = vmatprep.subr.bf16.mxu0 0
    %1276 = vmatpush1.bf16.msra.mxu0 %v393
    %1277 = vmatprep.subr.bf16.mxu0 0
    %1278 = vmatpush1.bf16.msra.mxu0 %v392
    %1279 = vmatprep.subr.bf16.mxu0 0
    %1280 = vmatpush1.bf16.msra.mxu0 %v391
    %1281 = vmatprep.subr.bf16.mxu0 0
    %1282 = vmatpush1.bf16.msra.mxu0 %v390
    %1283 = vmatprep.subr.bf16.mxu0 0
    %1284 = vmatpush1.bf16.msra.mxu0 %v389
    %1285 = vmatprep.subr.bf16.mxu0 0
    %1286 = vmatpush1.bf16.msra.mxu0 %v388
    %1287 = vmatprep.subr.bf16.mxu0 0
    %1288 = vmatpush1.bf16.msra.mxu0 %v387
    %1289 = vmatprep.subr.bf16.mxu0 0
    %1290 = vmatpush1.bf16.msra.mxu0 %v386
    %1291 = vmatprep.subr.bf16.mxu0 0
    %1292 = vmatpush2.bf16.msra.mxu0 0
    %1293 = vmatprep.subr.bf16.mxu0 0
    %1294 = vmatpush2.bf16.msra.mxu0 0
    %1295 = vmatprep.subr.bf16.mxu0 0
    %1296 = vmatpush2.bf16.msra.mxu0 0
    %1297 = vmatprep.subr.bf16.mxu0 0
    %1298 = vmatpush2.bf16.msra.mxu0 0
    %1299 = vmatprep.subr.bf16.mxu0 0
    %1300 = vmatpush2.bf16.msra.mxu0 0
    %1301 = vmatprep.subr.bf16.mxu0 0
    %1302 = vmatpush2.bf16.msra.mxu0 0
    %1303 = vmatprep.subr.bf16.mxu0 0
    %1304 = vmatpush2.bf16.msra.mxu0 0
    %1305 = vmatprep.subr.bf16.mxu0 0
    %1306 = vmatpush2.bf16.msra.mxu0 0
    %1307 = vmatprep.mubr.bf16.mxu0 0
    %1308 = vmatmul.mubr.bf16.gmra.mxu0 %v1273
    %v1309 = vpop.f32.mrf.mxu0
    %v1310 = vadd.f32 %v80, %v1309
    %v1311 = vpop.f32.mrf.mxu0
    %v1312 = vpop.f32.mrf.mxu0
    %v1313 = vpop.f32.mrf.mxu0
    %1314 = vdwg.mxu0
    %v1315 = vadd.f32 %v1310, %v1024
    %v1316 = vld [vmem:[%s1 + $0x4] sm:$0x1]
    %v1317 = vld [vmem:[%s1 + $0xc] sm:$0x1]
    %v1318 = vld [vmem:[%s1 + $0x14] sm:$0x1]
    %v1319 = vld [vmem:[%s1 + $0x1c] sm:$0x1]
    %v1320 = vld [vmem:[%s1 + $0x24] sm:$0x1]
    %v1321 = vld [vmem:[%s1 + $0x2c] sm:$0x1]
    %v1322 = vld [vmem:[%s1 + $0x34] sm:$0x1]
    %v1323 = vld [vmem:[%s1 + $0x3c] sm:$0x1]
    %v1324 = vpack.c.bf16 %v1315, %v1315
    %v1326 = vsel %vm104, %v1324, 0
    %1328 = vmatprep.subr.bf16.mxu0 0
    %1329 = vmatpush1.bf16.msra.mxu0 0
    %1330 = vmatprep.subr.bf16.mxu0 0
    %1331 = vmatpush1.bf16.msra.mxu0 0
    %1332 = vmatprep.subr.bf16.mxu0 0
    %1333 = vmatpush1.bf16.msra.mxu0 0
    %1334 = vmatprep.subr.bf16.mxu0 0
    %1335 = vmatpush1.bf16.msra.mxu0 0
    %1336 = vmatprep.subr.bf16.mxu0 0
    %1337 = vmatpush1.bf16.msra.mxu0 0
    %1338 = vmatprep.subr.bf16.mxu0 0
    %1339 = vmatpush1.bf16.msra.mxu0 0
    %1340 = vmatprep.subr.bf16.mxu0 0
    %1341 = vmatpush1.bf16.msra.mxu0 %v101
    %1342 = vmatprep.subr.bf16.mxu0 0
    %1343 = vmatpush1.bf16.msra.mxu0 %v100
    %1344 = vmatprep.subr.bf16.mxu0 0
    %1345 = vmatpush2.bf16.msra.mxu0 0
    %1346 = vmatprep.subr.bf16.mxu0 0
    %1347 = vmatpush2.bf16.msra.mxu0 0
    %1348 = vmatprep.subr.bf16.mxu0 0
    %1349 = vmatpush2.bf16.msra.mxu0 0
    %1350 = vmatprep.subr.bf16.mxu0 0
    %1351 = vmatpush2.bf16.msra.mxu0 0
    %1352 = vmatprep.subr.bf16.mxu0 0
    %1353 = vmatpush2.bf16.msra.mxu0 0
    %1354 = vmatprep.subr.bf16.mxu0 0
    %1355 = vmatpush2.bf16.msra.mxu0 0
    %1356 = vmatprep.subr.bf16.mxu0 0
    %1357 = vmatpush2.bf16.msra.mxu0 0
    %1358 = vmatprep.subr.bf16.mxu0 0
    %1359 = vmatpush2.bf16.msra.mxu0 0
    %1360 = vmatprep.mubr.bf16.mxu0 0
    %1361 = vmatmul.mubr.bf16.gmra.mxu0 %v1326
    %v1362 = vpop.f32.mrf.mxu0
    %v1363 = vadd.f32 0.0, %v1362
    %v1364 = vpop.f32.mrf.mxu0
    %v1365 = vpop.f32.mrf.mxu0
    %v1366 = vpop.f32.mrf.mxu0
    %1367 = vdwg.mxu0
    %v1369 = vrot.slane %v1363, 1
    %v1370 = vrot.slane %v1363, 2
    %v1371 = vrot.slane %v1363, 3
    %v1372 = vrot.slane %v1363, 4
    %v1373 = vrot.slane %v1363, 5
    %v1374 = vrot.slane %v1363, 6
    %v1375 = vrot.slane %v1363, 7
    %v1384 = vadd.f32 %v1316, %v1363
    %v1385 = vadd.f32 %v1317, %v1369
    %v1386 = vadd.f32 %v1318, %v1370
    %v1387 = vadd.f32 %v1319, %v1371
    %v1388 = vadd.f32 %v1320, %v1372
    %v1389 = vadd.f32 %v1321, %v1373
    %v1390 = vadd.f32 %v1322, %v1374
    %v1391 = vadd.f32 %v1323, %v1375
    %v1400 = vrot.slane %v1385, 7
    %v1401 = vsel %vm181, %v1400, %v1384
    %v1402 = vrot.slane %v1386, 6
    %v1403 = vsel %vm184, %v1402, %v1401
    %v1404 = vrot.slane %v1387, 5
    %v1405 = vsel %vm187, %v1404, %v1403
    %v1406 = vrot.slane %v1388, 4
    %v1407 = vsel %vm190, %v1406, %v1405
    %v1408 = vrot.slane %v1389, 3
    %v1409 = vsel %vm193, %v1408, %v1407
    %v1410 = vrot.slane %v1390, 2
    %v1411 = vsel %vm196, %v1410, %v1409
    %v1412 = vrot.slane %v1391, 1
    %v1413 = vsel %vm199, %v1412, %v1411
    %1415 = vadd.xlane.f32.xlu0 %v1413
    %v1416 = vpop.xlane.xlu0 %1415
    %v1417 = vmul.f32 %v1416, %v204
    %v1419 = vrot.slane %v1417, 1
    %v1420 = vrot.slane %v1417, 2
    %v1421 = vrot.slane %v1417, 3
    %v1422 = vrot.slane %v1417, 4
    %v1423 = vrot.slane %v1417, 5
    %v1424 = vrot.slane %v1417, 6
    %v1425 = vrot.slane %v1417, 7
    %v1434 = vsub.f32 %v1384, %v1417
    %v1435 = vsub.f32 %v1385, %v1419
    %v1436 = vsub.f32 %v1386, %v1420
    %v1437 = vsub.f32 %v1387, %v1421
    %v1438 = vsub.f32 %v1388, %v1422
    %v1439 = vsub.f32 %v1389, %v1423
    %v1440 = vsub.f32 %v1390, %v1424
    %v1441 = vsub.f32 %v1391, %v1425
    %v1442 = vmul.f32 %v1434, %v1434
    %v1443 = vmul.f32 %v1435, %v1435
    %v1444 = vmul.f32 %v1436, %v1436
    %v1445 = vmul.f32 %v1437, %v1437
    %v1446 = vmul.f32 %v1438, %v1438
    %v1447 = vmul.f32 %v1439, %v1439
    %v1448 = vmul.f32 %v1440, %v1440
    %v1449 = vmul.f32 %v1441, %v1441
    %v1458 = vrot.slane %v1443, 7
    %v1459 = vsel %vm181, %v1458, %v1442
    %v1460 = vrot.slane %v1444, 6
    %v1461 = vsel %vm184, %v1460, %v1459
    %v1462 = vrot.slane %v1445, 5
    %v1463 = vsel %vm187, %v1462, %v1461
    %v1464 = vrot.slane %v1446, 4
    %v1465 = vsel %vm190, %v1464, %v1463
    %v1466 = vrot.slane %v1447, 3
    %v1467 = vsel %vm193, %v1466, %v1465
    %v1468 = vrot.slane %v1448, 2
    %v1469 = vsel %vm196, %v1468, %v1467
    %v1470 = vrot.slane %v1449, 1
    %v1471 = vsel %vm199, %v1470, %v1469
    %1473 = vadd.xlane.f32.xlu0 %v1471
    %v1474 = vpop.xlane.xlu0 %1473
    %v1475 = vmul.f32 %v1474, %v204
    %v1476 = vadd.f32 %v1475, 1e-06
    %v1477 = vrsqrt.pop %v1476
    %v1479 = vrot.slane %v1477, 1
    %v1480 = vrot.slane %v1477, 2
    %v1481 = vrot.slane %v1477, 3
    %v1482 = vrot.slane %v1477, 4
    %v1483 = vrot.slane %v1477, 5
    %v1484 = vrot.slane %v1477, 6
    %v1485 = vrot.slane %v1477, 7
    %v1494 = vmul.f32 %v1434, %v1477
    %v1495 = vmul.f32 %v1435, %v1479
    %v1496 = vmul.f32 %v1436, %v1480
    %v1497 = vmul.f32 %v1437, %v1481
    %v1498 = vmul.f32 %v1438, %v1482
    %v1499 = vmul.f32 %v1439, %v1483
    %v1500 = vmul.f32 %v1440, %v1484
    %v1501 = vmul.f32 %v1441, %v1485
    %v1502 = vmul.f32 %v1494, %v66
    %v1503 = vmul.f32 %v1495, %v66
    %v1504 = vmul.f32 %v1496, %v66
    %v1505 = vmul.f32 %v1497, %v66
    %v1506 = vmul.f32 %v1498, %v66
    %v1507 = vmul.f32 %v1499, %v66
    %v1508 = vmul.f32 %v1500, %v66
    %v1509 = vmul.f32 %v1501, %v66
    %v1510 = vadd.f32 %v1502, %v73
    %v1511 = vadd.f32 %v1503, %v73
    %v1512 = vadd.f32 %v1504, %v73
    %v1513 = vadd.f32 %v1505, %v73
    %v1514 = vadd.f32 %v1506, %v73
    %v1515 = vadd.f32 %v1507, %v73
    %v1516 = vadd.f32 %v1508, %v73
    %v1517 = vadd.f32 %v1509, %v73
    %v1518 = vmax.f32 %v1510, 0.0
    %v1519 = vmax.f32 %v1511, 0.0
    %v1520 = vmax.f32 %v1512, 0.0
    %v1521 = vmax.f32 %v1513, 0.0
    %v1522 = vmax.f32 %v1514, 0.0
    %v1523 = vmax.f32 %v1515, 0.0
    %v1524 = vmax.f32 %v1516, 0.0
    %v1525 = vmax.f32 %v1517, 0.0
    %v1526 = vpack.c.bf16 %v1518, %v1518
    %v1527 = vpack.c.bf16 %v1519, %v1519
    %v1528 = vpack.c.bf16 %v1520, %v1520
    %v1529 = vpack.c.bf16 %v1521, %v1521
    %v1530 = vpack.c.bf16 %v1522, %v1522
    %v1531 = vpack.c.bf16 %v1523, %v1523
    %v1532 = vpack.c.bf16 %v1524, %v1524
    %v1533 = vpack.c.bf16 %v1525, %v1525
    %v1542 = vunpack.c.l.b16 %v1526
    %v1543 = vunpack.c.l.b16 %v1527
    %v1544 = vunpack.c.l.b16 %v1528
    %v1545 = vunpack.c.l.b16 %v1529
    %v1546 = vunpack.c.l.b16 %v1530
    %v1547 = vunpack.c.l.b16 %v1531
    %v1548 = vunpack.c.l.b16 %v1532
    %v1549 = vunpack.c.l.b16 %v1533
    %v1550 = vrot.slane %v1543, 7
    %v1551 = vsel %vm181, %v1550, %v1542
    %v1552 = vrot.slane %v1544, 6
    %v1553 = vsel %vm184, %v1552, %v1551
    %v1554 = vrot.slane %v1545, 5
    %v1555 = vsel %vm187, %v1554, %v1553
    %v1556 = vrot.slane %v1546, 4
    %v1557 = vsel %vm190, %v1556, %v1555
    %v1558 = vrot.slane %v1547, 3
    %v1559 = vsel %vm193, %v1558, %v1557
    %v1560 = vrot.slane %v1548, 2
    %v1561 = vsel %vm196, %v1560, %v1559
    %v1562 = vrot.slane %v1549, 1
    %v1563 = vsel %vm199, %v1562, %v1561
    %v1564 = vpack.c.b16 %v1563, %v1563
    %1566 = vmatprep.subr.bf16.mxu0 0
    %1567 = vmatpush1.bf16.msra.mxu0 %v393
    %1568 = vmatprep.subr.bf16.mxu0 0
    %1569 = vmatpush1.bf16.msra.mxu0 %v392
    %1570 = vmatprep.subr.bf16.mxu0 0
    %1571 = vmatpush1.bf16.msra.mxu0 %v391
    %1572 = vmatprep.subr.bf16.mxu0 0
    %1573 = vmatpush1.bf16.msra.mxu0 %v390
    %1574 = vmatprep.subr.bf16.mxu0 0
    %1575 = vmatpush1.bf16.msra.mxu0 %v389
    %1576 = vmatprep.subr.bf16.mxu0 0
    %1577 = vmatpush1.bf16.msra.mxu0 %v388
    %1578 = vmatprep.subr.bf16.mxu0 0
    %1579 = vmatpush1.bf16.msra.mxu0 %v387
    %1580 = vmatprep.subr.bf16.mxu0 0
    %1581 = vmatpush1.bf16.msra.mxu0 %v386
    %1582 = vmatprep.subr.bf16.mxu0 0
    %1583 = vmatpush2.bf16.msra.mxu0 0
    %1584 = vmatprep.subr.bf16.mxu0 0
    %1585 = vmatpush2.bf16.msra.mxu0 0
    %1586 = vmatprep.subr.bf16.mxu0 0
    %1587 = vmatpush2.bf16.msra.mxu0 0
    %1588 = vmatprep.subr.bf16.mxu0 0
    %1589 = vmatpush2.bf16.msra.mxu0 0
    %1590 = vmatprep.subr.bf16.mxu0 0
    %1591 = vmatpush2.bf16.msra.mxu0 0
    %1592 = vmatprep.subr.bf16.mxu0 0
    %1593 = vmatpush2.bf16.msra.mxu0 0
    %1594 = vmatprep.subr.bf16.mxu0 0
    %1595 = vmatpush2.bf16.msra.mxu0 0
    %1596 = vmatprep.subr.bf16.mxu0 0
    %1597 = vmatpush2.bf16.msra.mxu0 0
    %1598 = vmatprep.mubr.bf16.mxu0 0
    %1599 = vmatmul.mubr.bf16.gmra.mxu0 %v1564
    %v1600 = vpop.f32.mrf.mxu0
    %v1601 = vadd.f32 %v80, %v1600
    %v1602 = vpop.f32.mrf.mxu0
    %v1603 = vpop.f32.mrf.mxu0
    %v1604 = vpop.f32.mrf.mxu0
    %1605 = vdwg.mxu0
    %v1606 = vadd.f32 %v1601, %v1315
    %v1607 = vld [vmem:[%s1 + $0x5] sm:$0x1]
    %v1608 = vld [vmem:[%s1 + $0xd] sm:$0x1]
    %v1609 = vld [vmem:[%s1 + $0x15] sm:$0x1]
    %v1610 = vld [vmem:[%s1 + $0x1d] sm:$0x1]
    %v1611 = vld [vmem:[%s1 + $0x25] sm:$0x1]
    %v1612 = vld [vmem:[%s1 + $0x2d] sm:$0x1]
    %v1613 = vld [vmem:[%s1 + $0x35] sm:$0x1]
    %v1614 = vld [vmem:[%s1 + $0x3d] sm:$0x1]
    %v1615 = vpack.c.bf16 %v1606, %v1606
    %v1617 = vsel %vm104, %v1615, 0
    %1619 = vmatprep.subr.bf16.mxu0 0
    %1620 = vmatpush1.bf16.msra.mxu0 0
    %1621 = vmatprep.subr.bf16.mxu0 0
    %1622 = vmatpush1.bf16.msra.mxu0 0
    %1623 = vmatprep.subr.bf16.mxu0 0
    %1624 = vmatpush1.bf16.msra.mxu0 0
    %1625 = vmatprep.subr.bf16.mxu0 0
    %1626 = vmatpush1.bf16.msra.mxu0 0
    %1627 = vmatprep.subr.bf16.mxu0 0
    %1628 = vmatpush1.bf16.msra.mxu0 0
    %1629 = vmatprep.subr.bf16.mxu0 0
    %1630 = vmatpush1.bf16.msra.mxu0 0
    %1631 = vmatprep.subr.bf16.mxu0 0
    %1632 = vmatpush1.bf16.msra.mxu0 %v101
    %1633 = vmatprep.subr.bf16.mxu0 0
    %1634 = vmatpush1.bf16.msra.mxu0 %v100
    %1635 = vmatprep.subr.bf16.mxu0 0
    %1636 = vmatpush2.bf16.msra.mxu0 0
    %1637 = vmatprep.subr.bf16.mxu0 0
    %1638 = vmatpush2.bf16.msra.mxu0 0
    %1639 = vmatprep.subr.bf16.mxu0 0
    %1640 = vmatpush2.bf16.msra.mxu0 0
    %1641 = vmatprep.subr.bf16.mxu0 0
    %1642 = vmatpush2.bf16.msra.mxu0 0
    %1643 = vmatprep.subr.bf16.mxu0 0
    %1644 = vmatpush2.bf16.msra.mxu0 0
    %1645 = vmatprep.subr.bf16.mxu0 0
    %1646 = vmatpush2.bf16.msra.mxu0 0
    %1647 = vmatprep.subr.bf16.mxu0 0
    %1648 = vmatpush2.bf16.msra.mxu0 0
    %1649 = vmatprep.subr.bf16.mxu0 0
    %1650 = vmatpush2.bf16.msra.mxu0 0
    %1651 = vmatprep.mubr.bf16.mxu0 0
    %1652 = vmatmul.mubr.bf16.gmra.mxu0 %v1617
    %v1653 = vpop.f32.mrf.mxu0
    %v1654 = vadd.f32 0.0, %v1653
    %v1655 = vpop.f32.mrf.mxu0
    %v1656 = vpop.f32.mrf.mxu0
    %v1657 = vpop.f32.mrf.mxu0
    %1658 = vdwg.mxu0
    %v1660 = vrot.slane %v1654, 1
    %v1661 = vrot.slane %v1654, 2
    %v1662 = vrot.slane %v1654, 3
    %v1663 = vrot.slane %v1654, 4
    %v1664 = vrot.slane %v1654, 5
    %v1665 = vrot.slane %v1654, 6
    %v1666 = vrot.slane %v1654, 7
    %v1675 = vadd.f32 %v1607, %v1654
    %v1676 = vadd.f32 %v1608, %v1660
    %v1677 = vadd.f32 %v1609, %v1661
    %v1678 = vadd.f32 %v1610, %v1662
    %v1679 = vadd.f32 %v1611, %v1663
    %v1680 = vadd.f32 %v1612, %v1664
    %v1681 = vadd.f32 %v1613, %v1665
    %v1682 = vadd.f32 %v1614, %v1666
    %v1691 = vrot.slane %v1676, 7
    %v1692 = vsel %vm181, %v1691, %v1675
    %v1693 = vrot.slane %v1677, 6
    %v1694 = vsel %vm184, %v1693, %v1692
    %v1695 = vrot.slane %v1678, 5
    %v1696 = vsel %vm187, %v1695, %v1694
    %v1697 = vrot.slane %v1679, 4
    %v1698 = vsel %vm190, %v1697, %v1696
    %v1699 = vrot.slane %v1680, 3
    %v1700 = vsel %vm193, %v1699, %v1698
    %v1701 = vrot.slane %v1681, 2
    %v1702 = vsel %vm196, %v1701, %v1700
    %v1703 = vrot.slane %v1682, 1
    %v1704 = vsel %vm199, %v1703, %v1702
    %1706 = vadd.xlane.f32.xlu0 %v1704
    %v1707 = vpop.xlane.xlu0 %1706
    %v1708 = vmul.f32 %v1707, %v204
    %v1710 = vrot.slane %v1708, 1
    %v1711 = vrot.slane %v1708, 2
    %v1712 = vrot.slane %v1708, 3
    %v1713 = vrot.slane %v1708, 4
    %v1714 = vrot.slane %v1708, 5
    %v1715 = vrot.slane %v1708, 6
    %v1716 = vrot.slane %v1708, 7
    %v1725 = vsub.f32 %v1675, %v1708
    %v1726 = vsub.f32 %v1676, %v1710
    %v1727 = vsub.f32 %v1677, %v1711
    %v1728 = vsub.f32 %v1678, %v1712
    %v1729 = vsub.f32 %v1679, %v1713
    %v1730 = vsub.f32 %v1680, %v1714
    %v1731 = vsub.f32 %v1681, %v1715
    %v1732 = vsub.f32 %v1682, %v1716
    %v1733 = vmul.f32 %v1725, %v1725
    %v1734 = vmul.f32 %v1726, %v1726
    %v1735 = vmul.f32 %v1727, %v1727
    %v1736 = vmul.f32 %v1728, %v1728
    %v1737 = vmul.f32 %v1729, %v1729
    %v1738 = vmul.f32 %v1730, %v1730
    %v1739 = vmul.f32 %v1731, %v1731
    %v1740 = vmul.f32 %v1732, %v1732
    %v1749 = vrot.slane %v1734, 7
    %v1750 = vsel %vm181, %v1749, %v1733
    %v1751 = vrot.slane %v1735, 6
    %v1752 = vsel %vm184, %v1751, %v1750
    %v1753 = vrot.slane %v1736, 5
    %v1754 = vsel %vm187, %v1753, %v1752
    %v1755 = vrot.slane %v1737, 4
    %v1756 = vsel %vm190, %v1755, %v1754
    %v1757 = vrot.slane %v1738, 3
    %v1758 = vsel %vm193, %v1757, %v1756
    %v1759 = vrot.slane %v1739, 2
    %v1760 = vsel %vm196, %v1759, %v1758
    %v1761 = vrot.slane %v1740, 1
    %v1762 = vsel %vm199, %v1761, %v1760
    %1764 = vadd.xlane.f32.xlu0 %v1762
    %v1765 = vpop.xlane.xlu0 %1764
    %v1766 = vmul.f32 %v1765, %v204
    %v1767 = vadd.f32 %v1766, 1e-06
    %v1768 = vrsqrt.pop %v1767
    %v1770 = vrot.slane %v1768, 1
    %v1771 = vrot.slane %v1768, 2
    %v1772 = vrot.slane %v1768, 3
    %v1773 = vrot.slane %v1768, 4
    %v1774 = vrot.slane %v1768, 5
    %v1775 = vrot.slane %v1768, 6
    %v1776 = vrot.slane %v1768, 7
    %v1785 = vmul.f32 %v1725, %v1768
    %v1786 = vmul.f32 %v1726, %v1770
    %v1787 = vmul.f32 %v1727, %v1771
    %v1788 = vmul.f32 %v1728, %v1772
    %v1789 = vmul.f32 %v1729, %v1773
    %v1790 = vmul.f32 %v1730, %v1774
    %v1791 = vmul.f32 %v1731, %v1775
    %v1792 = vmul.f32 %v1732, %v1776
    %v1793 = vmul.f32 %v1785, %v66
    %v1794 = vmul.f32 %v1786, %v66
    %v1795 = vmul.f32 %v1787, %v66
    %v1796 = vmul.f32 %v1788, %v66
    %v1797 = vmul.f32 %v1789, %v66
    %v1798 = vmul.f32 %v1790, %v66
    %v1799 = vmul.f32 %v1791, %v66
    %v1800 = vmul.f32 %v1792, %v66
    %v1801 = vadd.f32 %v1793, %v73
    %v1802 = vadd.f32 %v1794, %v73
    %v1803 = vadd.f32 %v1795, %v73
    %v1804 = vadd.f32 %v1796, %v73
    %v1805 = vadd.f32 %v1797, %v73
    %v1806 = vadd.f32 %v1798, %v73
    %v1807 = vadd.f32 %v1799, %v73
    %v1808 = vadd.f32 %v1800, %v73
    %v1809 = vmax.f32 %v1801, 0.0
    %v1810 = vmax.f32 %v1802, 0.0
    %v1811 = vmax.f32 %v1803, 0.0
    %v1812 = vmax.f32 %v1804, 0.0
    %v1813 = vmax.f32 %v1805, 0.0
    %v1814 = vmax.f32 %v1806, 0.0
    %v1815 = vmax.f32 %v1807, 0.0
    %v1816 = vmax.f32 %v1808, 0.0
    %v1817 = vpack.c.bf16 %v1809, %v1809
    %v1818 = vpack.c.bf16 %v1810, %v1810
    %v1819 = vpack.c.bf16 %v1811, %v1811
    %v1820 = vpack.c.bf16 %v1812, %v1812
    %v1821 = vpack.c.bf16 %v1813, %v1813
    %v1822 = vpack.c.bf16 %v1814, %v1814
    %v1823 = vpack.c.bf16 %v1815, %v1815
    %v1824 = vpack.c.bf16 %v1816, %v1816
    %v1833 = vunpack.c.l.b16 %v1817
    %v1834 = vunpack.c.l.b16 %v1818
    %v1835 = vunpack.c.l.b16 %v1819
    %v1836 = vunpack.c.l.b16 %v1820
    %v1837 = vunpack.c.l.b16 %v1821
    %v1838 = vunpack.c.l.b16 %v1822
    %v1839 = vunpack.c.l.b16 %v1823
    %v1840 = vunpack.c.l.b16 %v1824
    %v1841 = vrot.slane %v1834, 7
    %v1842 = vsel %vm181, %v1841, %v1833
    %v1843 = vrot.slane %v1835, 6
    %v1844 = vsel %vm184, %v1843, %v1842
    %v1845 = vrot.slane %v1836, 5
    %v1846 = vsel %vm187, %v1845, %v1844
    %v1847 = vrot.slane %v1837, 4
    %v1848 = vsel %vm190, %v1847, %v1846
    %v1849 = vrot.slane %v1838, 3
    %v1850 = vsel %vm193, %v1849, %v1848
    %v1851 = vrot.slane %v1839, 2
    %v1852 = vsel %vm196, %v1851, %v1850
    %v1853 = vrot.slane %v1840, 1
    %v1854 = vsel %vm199, %v1853, %v1852
    %v1855 = vpack.c.b16 %v1854, %v1854
    %1857 = vmatprep.subr.bf16.mxu0 0
    %1858 = vmatpush1.bf16.msra.mxu0 %v393
    %1859 = vmatprep.subr.bf16.mxu0 0
    %1860 = vmatpush1.bf16.msra.mxu0 %v392
    %1861 = vmatprep.subr.bf16.mxu0 0
    %1862 = vmatpush1.bf16.msra.mxu0 %v391
    %1863 = vmatprep.subr.bf16.mxu0 0
    %1864 = vmatpush1.bf16.msra.mxu0 %v390
    %1865 = vmatprep.subr.bf16.mxu0 0
    %1866 = vmatpush1.bf16.msra.mxu0 %v389
    %1867 = vmatprep.subr.bf16.mxu0 0
    %1868 = vmatpush1.bf16.msra.mxu0 %v388
    %1869 = vmatprep.subr.bf16.mxu0 0
    %1870 = vmatpush1.bf16.msra.mxu0 %v387
    %1871 = vmatprep.subr.bf16.mxu0 0
    %1872 = vmatpush1.bf16.msra.mxu0 %v386
    %1873 = vmatprep.subr.bf16.mxu0 0
    %1874 = vmatpush2.bf16.msra.mxu0 0
    %1875 = vmatprep.subr.bf16.mxu0 0
    %1876 = vmatpush2.bf16.msra.mxu0 0
    %1877 = vmatprep.subr.bf16.mxu0 0
    %1878 = vmatpush2.bf16.msra.mxu0 0
    %1879 = vmatprep.subr.bf16.mxu0 0
    %1880 = vmatpush2.bf16.msra.mxu0 0
    %1881 = vmatprep.subr.bf16.mxu0 0
    %1882 = vmatpush2.bf16.msra.mxu0 0
    %1883 = vmatprep.subr.bf16.mxu0 0
    %1884 = vmatpush2.bf16.msra.mxu0 0
    %1885 = vmatprep.subr.bf16.mxu0 0
    %1886 = vmatpush2.bf16.msra.mxu0 0
    %1887 = vmatprep.subr.bf16.mxu0 0
    %1888 = vmatpush2.bf16.msra.mxu0 0
    %1889 = vmatprep.mubr.bf16.mxu0 0
    %1890 = vmatmul.mubr.bf16.gmra.mxu0 %v1855
    %v1891 = vpop.f32.mrf.mxu0
    %v1892 = vadd.f32 %v80, %v1891
    %v1893 = vpop.f32.mrf.mxu0
    %v1894 = vpop.f32.mrf.mxu0
    %v1895 = vpop.f32.mrf.mxu0
    %1896 = vdwg.mxu0
    %v1897 = vadd.f32 %v1892, %v1606
    %v1898 = vld [vmem:[%s1 + $0x6] sm:$0x1]
    %v1899 = vld [vmem:[%s1 + $0xe] sm:$0x1]
    %v1900 = vld [vmem:[%s1 + $0x16] sm:$0x1]
    %v1901 = vld [vmem:[%s1 + $0x1e] sm:$0x1]
    %v1902 = vld [vmem:[%s1 + $0x26] sm:$0x1]
    %v1903 = vld [vmem:[%s1 + $0x2e] sm:$0x1]
    %v1904 = vld [vmem:[%s1 + $0x36] sm:$0x1]
    %v1905 = vld [vmem:[%s1 + $0x3e] sm:$0x1]
    %v1906 = vpack.c.bf16 %v1897, %v1897
    %v1908 = vsel %vm104, %v1906, 0
    %1910 = vmatprep.subr.bf16.mxu0 0
    %1911 = vmatpush1.bf16.msra.mxu0 0
    %1912 = vmatprep.subr.bf16.mxu0 0
    %1913 = vmatpush1.bf16.msra.mxu0 0
    %1914 = vmatprep.subr.bf16.mxu0 0
    %1915 = vmatpush1.bf16.msra.mxu0 0
    %1916 = vmatprep.subr.bf16.mxu0 0
    %1917 = vmatpush1.bf16.msra.mxu0 0
    %1918 = vmatprep.subr.bf16.mxu0 0
    %1919 = vmatpush1.bf16.msra.mxu0 0
    %1920 = vmatprep.subr.bf16.mxu0 0
    %1921 = vmatpush1.bf16.msra.mxu0 0
    %1922 = vmatprep.subr.bf16.mxu0 0
    %1923 = vmatpush1.bf16.msra.mxu0 %v101
    %1924 = vmatprep.subr.bf16.mxu0 0
    %1925 = vmatpush1.bf16.msra.mxu0 %v100
    %1926 = vmatprep.subr.bf16.mxu0 0
    %1927 = vmatpush2.bf16.msra.mxu0 0
    %1928 = vmatprep.subr.bf16.mxu0 0
    %1929 = vmatpush2.bf16.msra.mxu0 0
    %1930 = vmatprep.subr.bf16.mxu0 0
    %1931 = vmatpush2.bf16.msra.mxu0 0
    %1932 = vmatprep.subr.bf16.mxu0 0
    %1933 = vmatpush2.bf16.msra.mxu0 0
    %1934 = vmatprep.subr.bf16.mxu0 0
    %1935 = vmatpush2.bf16.msra.mxu0 0
    %1936 = vmatprep.subr.bf16.mxu0 0
    %1937 = vmatpush2.bf16.msra.mxu0 0
    %1938 = vmatprep.subr.bf16.mxu0 0
    %1939 = vmatpush2.bf16.msra.mxu0 0
    %1940 = vmatprep.subr.bf16.mxu0 0
    %1941 = vmatpush2.bf16.msra.mxu0 0
    %1942 = vmatprep.mubr.bf16.mxu0 0
    %1943 = vmatmul.mubr.bf16.gmra.mxu0 %v1908
    %v1944 = vpop.f32.mrf.mxu0
    %v1945 = vadd.f32 0.0, %v1944
    %v1946 = vpop.f32.mrf.mxu0
    %v1947 = vpop.f32.mrf.mxu0
    %v1948 = vpop.f32.mrf.mxu0
    %1949 = vdwg.mxu0
    %v1951 = vrot.slane %v1945, 1
    %v1952 = vrot.slane %v1945, 2
    %v1953 = vrot.slane %v1945, 3
    %v1954 = vrot.slane %v1945, 4
    %v1955 = vrot.slane %v1945, 5
    %v1956 = vrot.slane %v1945, 6
    %v1957 = vrot.slane %v1945, 7
    %v1966 = vadd.f32 %v1898, %v1945
    %v1967 = vadd.f32 %v1899, %v1951
    %v1968 = vadd.f32 %v1900, %v1952
    %v1969 = vadd.f32 %v1901, %v1953
    %v1970 = vadd.f32 %v1902, %v1954
    %v1971 = vadd.f32 %v1903, %v1955
    %v1972 = vadd.f32 %v1904, %v1956
    %v1973 = vadd.f32 %v1905, %v1957
    %v1982 = vrot.slane %v1967, 7
    %v1983 = vsel %vm181, %v1982, %v1966
    %v1984 = vrot.slane %v1968, 6
    %v1985 = vsel %vm184, %v1984, %v1983
    %v1986 = vrot.slane %v1969, 5
    %v1987 = vsel %vm187, %v1986, %v1985
    %v1988 = vrot.slane %v1970, 4
    %v1989 = vsel %vm190, %v1988, %v1987
    %v1990 = vrot.slane %v1971, 3
    %v1991 = vsel %vm193, %v1990, %v1989
    %v1992 = vrot.slane %v1972, 2
    %v1993 = vsel %vm196, %v1992, %v1991
    %v1994 = vrot.slane %v1973, 1
    %v1995 = vsel %vm199, %v1994, %v1993
    %1997 = vadd.xlane.f32.xlu0 %v1995
    %v1998 = vpop.xlane.xlu0 %1997
    %v1999 = vmul.f32 %v1998, %v204
    %v2001 = vrot.slane %v1999, 1
    %v2002 = vrot.slane %v1999, 2
    %v2003 = vrot.slane %v1999, 3
    %v2004 = vrot.slane %v1999, 4
    %v2005 = vrot.slane %v1999, 5
    %v2006 = vrot.slane %v1999, 6
    %v2007 = vrot.slane %v1999, 7
    %v2016 = vsub.f32 %v1966, %v1999
    %v2017 = vsub.f32 %v1967, %v2001
    %v2018 = vsub.f32 %v1968, %v2002
    %v2019 = vsub.f32 %v1969, %v2003
    %v2020 = vsub.f32 %v1970, %v2004
    %v2021 = vsub.f32 %v1971, %v2005
    %v2022 = vsub.f32 %v1972, %v2006
    %v2023 = vsub.f32 %v1973, %v2007
    %v2024 = vmul.f32 %v2016, %v2016
    %v2025 = vmul.f32 %v2017, %v2017
    %v2026 = vmul.f32 %v2018, %v2018
    %v2027 = vmul.f32 %v2019, %v2019
    %v2028 = vmul.f32 %v2020, %v2020
    %v2029 = vmul.f32 %v2021, %v2021
    %v2030 = vmul.f32 %v2022, %v2022
    %v2031 = vmul.f32 %v2023, %v2023
    %v2040 = vrot.slane %v2025, 7
    %v2041 = vsel %vm181, %v2040, %v2024
    %v2042 = vrot.slane %v2026, 6
    %v2043 = vsel %vm184, %v2042, %v2041
    %v2044 = vrot.slane %v2027, 5
    %v2045 = vsel %vm187, %v2044, %v2043
    %v2046 = vrot.slane %v2028, 4
    %v2047 = vsel %vm190, %v2046, %v2045
    %v2048 = vrot.slane %v2029, 3
    %v2049 = vsel %vm193, %v2048, %v2047
    %v2050 = vrot.slane %v2030, 2
    %v2051 = vsel %vm196, %v2050, %v2049
    %v2052 = vrot.slane %v2031, 1
    %v2053 = vsel %vm199, %v2052, %v2051
    %2055 = vadd.xlane.f32.xlu0 %v2053
    %v2056 = vpop.xlane.xlu0 %2055
    %v2057 = vmul.f32 %v2056, %v204
    %v2058 = vadd.f32 %v2057, 1e-06
    %v2059 = vrsqrt.pop %v2058
    %v2061 = vrot.slane %v2059, 1
    %v2062 = vrot.slane %v2059, 2
    %v2063 = vrot.slane %v2059, 3
    %v2064 = vrot.slane %v2059, 4
    %v2065 = vrot.slane %v2059, 5
    %v2066 = vrot.slane %v2059, 6
    %v2067 = vrot.slane %v2059, 7
    %v2076 = vmul.f32 %v2016, %v2059
    %v2077 = vmul.f32 %v2017, %v2061
    %v2078 = vmul.f32 %v2018, %v2062
    %v2079 = vmul.f32 %v2019, %v2063
    %v2080 = vmul.f32 %v2020, %v2064
    %v2081 = vmul.f32 %v2021, %v2065
    %v2082 = vmul.f32 %v2022, %v2066
    %v2083 = vmul.f32 %v2023, %v2067
    %v2084 = vmul.f32 %v2076, %v66
    %v2085 = vmul.f32 %v2077, %v66
    %v2086 = vmul.f32 %v2078, %v66
    %v2087 = vmul.f32 %v2079, %v66
    %v2088 = vmul.f32 %v2080, %v66
    %v2089 = vmul.f32 %v2081, %v66
    %v2090 = vmul.f32 %v2082, %v66
    %v2091 = vmul.f32 %v2083, %v66
    %v2092 = vadd.f32 %v2084, %v73
    %v2093 = vadd.f32 %v2085, %v73
    %v2094 = vadd.f32 %v2086, %v73
    %v2095 = vadd.f32 %v2087, %v73
    %v2096 = vadd.f32 %v2088, %v73
    %v2097 = vadd.f32 %v2089, %v73
    %v2098 = vadd.f32 %v2090, %v73
    %v2099 = vadd.f32 %v2091, %v73
    %v2100 = vmax.f32 %v2092, 0.0
    %v2101 = vmax.f32 %v2093, 0.0
    %v2102 = vmax.f32 %v2094, 0.0
    %v2103 = vmax.f32 %v2095, 0.0
    %v2104 = vmax.f32 %v2096, 0.0
    %v2105 = vmax.f32 %v2097, 0.0
    %v2106 = vmax.f32 %v2098, 0.0
    %v2107 = vmax.f32 %v2099, 0.0
    %v2108 = vpack.c.bf16 %v2100, %v2100
    %v2109 = vpack.c.bf16 %v2101, %v2101
    %v2110 = vpack.c.bf16 %v2102, %v2102
    %v2111 = vpack.c.bf16 %v2103, %v2103
    %v2112 = vpack.c.bf16 %v2104, %v2104
    %v2113 = vpack.c.bf16 %v2105, %v2105
    %v2114 = vpack.c.bf16 %v2106, %v2106
    %v2115 = vpack.c.bf16 %v2107, %v2107
    %v2124 = vunpack.c.l.b16 %v2108
    %v2125 = vunpack.c.l.b16 %v2109
    %v2126 = vunpack.c.l.b16 %v2110
    %v2127 = vunpack.c.l.b16 %v2111
    %v2128 = vunpack.c.l.b16 %v2112
    %v2129 = vunpack.c.l.b16 %v2113
    %v2130 = vunpack.c.l.b16 %v2114
    %v2131 = vunpack.c.l.b16 %v2115
    %v2132 = vrot.slane %v2125, 7
    %v2133 = vsel %vm181, %v2132, %v2124
    %v2134 = vrot.slane %v2126, 6
    %v2135 = vsel %vm184, %v2134, %v2133
    %v2136 = vrot.slane %v2127, 5
    %v2137 = vsel %vm187, %v2136, %v2135
    %v2138 = vrot.slane %v2128, 4
    %v2139 = vsel %vm190, %v2138, %v2137
    %v2140 = vrot.slane %v2129, 3
    %v2141 = vsel %vm193, %v2140, %v2139
    %v2142 = vrot.slane %v2130, 2
    %v2143 = vsel %vm196, %v2142, %v2141
    %v2144 = vrot.slane %v2131, 1
    %v2145 = vsel %vm199, %v2144, %v2143
    %v2146 = vpack.c.b16 %v2145, %v2145
    %2148 = vmatprep.subr.bf16.mxu0 0
    %2149 = vmatpush1.bf16.msra.mxu0 %v393
    %2150 = vmatprep.subr.bf16.mxu0 0
    %2151 = vmatpush1.bf16.msra.mxu0 %v392
    %2152 = vmatprep.subr.bf16.mxu0 0
    %2153 = vmatpush1.bf16.msra.mxu0 %v391
    %2154 = vmatprep.subr.bf16.mxu0 0
    %2155 = vmatpush1.bf16.msra.mxu0 %v390
    %2156 = vmatprep.subr.bf16.mxu0 0
    %2157 = vmatpush1.bf16.msra.mxu0 %v389
    %2158 = vmatprep.subr.bf16.mxu0 0
    %2159 = vmatpush1.bf16.msra.mxu0 %v388
    %2160 = vmatprep.subr.bf16.mxu0 0
    %2161 = vmatpush1.bf16.msra.mxu0 %v387
    %2162 = vmatprep.subr.bf16.mxu0 0
    %2163 = vmatpush1.bf16.msra.mxu0 %v386
    %2164 = vmatprep.subr.bf16.mxu0 0
    %2165 = vmatpush2.bf16.msra.mxu0 0
    %2166 = vmatprep.subr.bf16.mxu0 0
    %2167 = vmatpush2.bf16.msra.mxu0 0
    %2168 = vmatprep.subr.bf16.mxu0 0
    %2169 = vmatpush2.bf16.msra.mxu0 0
    %2170 = vmatprep.subr.bf16.mxu0 0
    %2171 = vmatpush2.bf16.msra.mxu0 0
    %2172 = vmatprep.subr.bf16.mxu0 0
    %2173 = vmatpush2.bf16.msra.mxu0 0
    %2174 = vmatprep.subr.bf16.mxu0 0
    %2175 = vmatpush2.bf16.msra.mxu0 0
    %2176 = vmatprep.subr.bf16.mxu0 0
    %2177 = vmatpush2.bf16.msra.mxu0 0
    %2178 = vmatprep.subr.bf16.mxu0 0
    %2179 = vmatpush2.bf16.msra.mxu0 0
    %2180 = vmatprep.mubr.bf16.mxu0 0
    %2181 = vmatmul.mubr.bf16.gmra.mxu0 %v2146
    %v2182 = vpop.f32.mrf.mxu0
    %v2183 = vadd.f32 %v80, %v2182
    %v2184 = vpop.f32.mrf.mxu0
    %v2185 = vpop.f32.mrf.mxu0
    %v2186 = vpop.f32.mrf.mxu0
    %2187 = vdwg.mxu0
    %v2188 = vadd.f32 %v2183, %v1897
    %v2189 = vld [vmem:[%s1 + $0x7] sm:$0x1]
    %v2190 = vld [vmem:[%s1 + $0xf] sm:$0x1]
    %v2191 = vld [vmem:[%s1 + $0x17] sm:$0x1]
    %v2192 = vld [vmem:[%s1 + $0x1f] sm:$0x1]
    %v2193 = vld [vmem:[%s1 + $0x27] sm:$0x1]
    %v2194 = vld [vmem:[%s1 + $0x2f] sm:$0x1]
    %v2195 = vld [vmem:[%s1 + $0x37] sm:$0x1]
    %v2196 = vld [vmem:[%s1 + $0x3f] sm:$0x1]
    %v2197 = vpack.c.bf16 %v2188, %v2188
    %v2199 = vsel %vm104, %v2197, 0
    %2201 = vmatprep.subr.bf16.mxu0 0
    %2202 = vmatpush1.bf16.msra.mxu0 0
    %2203 = vmatprep.subr.bf16.mxu0 0
    %2204 = vmatpush1.bf16.msra.mxu0 0
    %2205 = vmatprep.subr.bf16.mxu0 0
    %2206 = vmatpush1.bf16.msra.mxu0 0
    %2207 = vmatprep.subr.bf16.mxu0 0
    %2208 = vmatpush1.bf16.msra.mxu0 0
    %2209 = vmatprep.subr.bf16.mxu0 0
    %2210 = vmatpush1.bf16.msra.mxu0 0
    %2211 = vmatprep.subr.bf16.mxu0 0
    %2212 = vmatpush1.bf16.msra.mxu0 0
    %2213 = vmatprep.subr.bf16.mxu0 0
    %2214 = vmatpush1.bf16.msra.mxu0 %v101
    %2215 = vmatprep.subr.bf16.mxu0 0
    %2216 = vmatpush1.bf16.msra.mxu0 %v100
    %2217 = vmatprep.subr.bf16.mxu0 0
    %2218 = vmatpush2.bf16.msra.mxu0 0
    %2219 = vmatprep.subr.bf16.mxu0 0
    %2220 = vmatpush2.bf16.msra.mxu0 0
    %2221 = vmatprep.subr.bf16.mxu0 0
    %2222 = vmatpush2.bf16.msra.mxu0 0
    %2223 = vmatprep.subr.bf16.mxu0 0
    %2224 = vmatpush2.bf16.msra.mxu0 0
    %2225 = vmatprep.subr.bf16.mxu0 0
    %2226 = vmatpush2.bf16.msra.mxu0 0
    %2227 = vmatprep.subr.bf16.mxu0 0
    %2228 = vmatpush2.bf16.msra.mxu0 0
    %2229 = vmatprep.subr.bf16.mxu0 0
    %2230 = vmatpush2.bf16.msra.mxu0 0
    %2231 = vmatprep.subr.bf16.mxu0 0
    %2232 = vmatpush2.bf16.msra.mxu0 0
    %2233 = vmatprep.mubr.bf16.mxu0 0
    %2234 = vmatmul.mubr.bf16.gmra.mxu0 %v2199
    %v2235 = vpop.f32.mrf.mxu0
    %v2236 = vadd.f32 0.0, %v2235
    %v2237 = vpop.f32.mrf.mxu0
    %v2238 = vpop.f32.mrf.mxu0
    %v2239 = vpop.f32.mrf.mxu0
    %2240 = vdwg.mxu0
    %v2242 = vrot.slane %v2236, 1
    %v2243 = vrot.slane %v2236, 2
    %v2244 = vrot.slane %v2236, 3
    %v2245 = vrot.slane %v2236, 4
    %v2246 = vrot.slane %v2236, 5
    %v2247 = vrot.slane %v2236, 6
    %v2248 = vrot.slane %v2236, 7
    %v2257 = vadd.f32 %v2189, %v2236
    %v2258 = vadd.f32 %v2190, %v2242
    %v2259 = vadd.f32 %v2191, %v2243
    %v2260 = vadd.f32 %v2192, %v2244
    %v2261 = vadd.f32 %v2193, %v2245
    %v2262 = vadd.f32 %v2194, %v2246
    %v2263 = vadd.f32 %v2195, %v2247
    %v2264 = vadd.f32 %v2196, %v2248
    %v2273 = vrot.slane %v2258, 7
    %v2274 = vsel %vm181, %v2273, %v2257
    %v2275 = vrot.slane %v2259, 6
    %v2276 = vsel %vm184, %v2275, %v2274
    %v2277 = vrot.slane %v2260, 5
    %v2278 = vsel %vm187, %v2277, %v2276
    %v2279 = vrot.slane %v2261, 4
    %v2280 = vsel %vm190, %v2279, %v2278
    %v2281 = vrot.slane %v2262, 3
    %v2282 = vsel %vm193, %v2281, %v2280
    %v2283 = vrot.slane %v2263, 2
    %v2284 = vsel %vm196, %v2283, %v2282
    %v2285 = vrot.slane %v2264, 1
    %v2286 = vsel %vm199, %v2285, %v2284
    %2288 = vadd.xlane.f32.xlu0 %v2286
    %v2289 = vpop.xlane.xlu0 %2288
    %v2290 = vmul.f32 %v2289, %v204
    %v2292 = vrot.slane %v2290, 1
    %v2293 = vrot.slane %v2290, 2
    %v2294 = vrot.slane %v2290, 3
    %v2295 = vrot.slane %v2290, 4
    %v2296 = vrot.slane %v2290, 5
    %v2297 = vrot.slane %v2290, 6
    %v2298 = vrot.slane %v2290, 7
    %v2307 = vsub.f32 %v2257, %v2290
    %v2308 = vsub.f32 %v2258, %v2292
    %v2309 = vsub.f32 %v2259, %v2293
    %v2310 = vsub.f32 %v2260, %v2294
    %v2311 = vsub.f32 %v2261, %v2295
    %v2312 = vsub.f32 %v2262, %v2296
    %v2313 = vsub.f32 %v2263, %v2297
    %v2314 = vsub.f32 %v2264, %v2298
    %v2315 = vmul.f32 %v2307, %v2307
    %v2316 = vmul.f32 %v2308, %v2308
    %v2317 = vmul.f32 %v2309, %v2309
    %v2318 = vmul.f32 %v2310, %v2310
    %v2319 = vmul.f32 %v2311, %v2311
    %v2320 = vmul.f32 %v2312, %v2312
    %v2321 = vmul.f32 %v2313, %v2313
    %v2322 = vmul.f32 %v2314, %v2314
    %v2331 = vrot.slane %v2316, 7
    %v2332 = vsel %vm181, %v2331, %v2315
    %v2333 = vrot.slane %v2317, 6
    %v2334 = vsel %vm184, %v2333, %v2332
    %v2335 = vrot.slane %v2318, 5
    %v2336 = vsel %vm187, %v2335, %v2334
    %v2337 = vrot.slane %v2319, 4
    %v2338 = vsel %vm190, %v2337, %v2336
    %v2339 = vrot.slane %v2320, 3
    %v2340 = vsel %vm193, %v2339, %v2338
    %v2341 = vrot.slane %v2321, 2
    %v2342 = vsel %vm196, %v2341, %v2340
    %v2343 = vrot.slane %v2322, 1
    %v2344 = vsel %vm199, %v2343, %v2342
    %2346 = vadd.xlane.f32.xlu0 %v2344
    %v2347 = vpop.xlane.xlu0 %2346
    %v2348 = vmul.f32 %v2347, %v204
    %v2349 = vadd.f32 %v2348, 1e-06
    %v2350 = vrsqrt.pop %v2349
    %v2352 = vrot.slane %v2350, 1
    %v2353 = vrot.slane %v2350, 2
    %v2354 = vrot.slane %v2350, 3
    %v2355 = vrot.slane %v2350, 4
    %v2356 = vrot.slane %v2350, 5
    %v2357 = vrot.slane %v2350, 6
    %v2358 = vrot.slane %v2350, 7
    %v2367 = vmul.f32 %v2307, %v2350
    %v2368 = vmul.f32 %v2308, %v2352
    %v2369 = vmul.f32 %v2309, %v2353
    %v2370 = vmul.f32 %v2310, %v2354
    %v2371 = vmul.f32 %v2311, %v2355
    %v2372 = vmul.f32 %v2312, %v2356
    %v2373 = vmul.f32 %v2313, %v2357
    %v2374 = vmul.f32 %v2314, %v2358
    %v2375 = vmul.f32 %v2367, %v66
    %v2376 = vmul.f32 %v2368, %v66
    %v2377 = vmul.f32 %v2369, %v66
    %v2378 = vmul.f32 %v2370, %v66
    %v2379 = vmul.f32 %v2371, %v66
    %v2380 = vmul.f32 %v2372, %v66
    %v2381 = vmul.f32 %v2373, %v66
    %v2382 = vmul.f32 %v2374, %v66
    %v2383 = vadd.f32 %v2375, %v73
    %v2384 = vadd.f32 %v2376, %v73
    %v2385 = vadd.f32 %v2377, %v73
    %v2386 = vadd.f32 %v2378, %v73
    %v2387 = vadd.f32 %v2379, %v73
    %v2388 = vadd.f32 %v2380, %v73
    %v2389 = vadd.f32 %v2381, %v73
    %v2390 = vadd.f32 %v2382, %v73
    %v2391 = vmax.f32 %v2383, 0.0
    %v2392 = vmax.f32 %v2384, 0.0
    %v2393 = vmax.f32 %v2385, 0.0
    %v2394 = vmax.f32 %v2386, 0.0
    %v2395 = vmax.f32 %v2387, 0.0
    %v2396 = vmax.f32 %v2388, 0.0
    %v2397 = vmax.f32 %v2389, 0.0
    %v2398 = vmax.f32 %v2390, 0.0
    %v2399 = vpack.c.bf16 %v2391, %v2391
    %v2400 = vpack.c.bf16 %v2392, %v2392
    %v2401 = vpack.c.bf16 %v2393, %v2393
    %v2402 = vpack.c.bf16 %v2394, %v2394
    %v2403 = vpack.c.bf16 %v2395, %v2395
    %v2404 = vpack.c.bf16 %v2396, %v2396
    %v2405 = vpack.c.bf16 %v2397, %v2397
    %v2406 = vpack.c.bf16 %v2398, %v2398
    %v2415 = vunpack.c.l.b16 %v2399
    %v2416 = vunpack.c.l.b16 %v2400
    %v2417 = vunpack.c.l.b16 %v2401
    %v2418 = vunpack.c.l.b16 %v2402
    %v2419 = vunpack.c.l.b16 %v2403
    %v2420 = vunpack.c.l.b16 %v2404
    %v2421 = vunpack.c.l.b16 %v2405
    %v2422 = vunpack.c.l.b16 %v2406
    %v2423 = vrot.slane %v2416, 7
    %v2424 = vsel %vm181, %v2423, %v2415
    %v2425 = vrot.slane %v2417, 6
    %v2426 = vsel %vm184, %v2425, %v2424
    %v2427 = vrot.slane %v2418, 5
    %v2428 = vsel %vm187, %v2427, %v2426
    %v2429 = vrot.slane %v2419, 4
    %v2430 = vsel %vm190, %v2429, %v2428
    %v2431 = vrot.slane %v2420, 3
    %v2432 = vsel %vm193, %v2431, %v2430
    %v2433 = vrot.slane %v2421, 2
    %v2434 = vsel %vm196, %v2433, %v2432
    %v2435 = vrot.slane %v2422, 1
    %v2436 = vsel %vm199, %v2435, %v2434
    %v2437 = vpack.c.b16 %v2436, %v2436
    %2439 = vmatprep.subr.bf16.mxu0 0
    %2440 = vmatpush1.bf16.msra.mxu0 %v393
    %2441 = vmatprep.subr.bf16.mxu0 0
    %2442 = vmatpush1.bf16.msra.mxu0 %v392
    %2443 = vmatprep.subr.bf16.mxu0 0
    %2444 = vmatpush1.bf16.msra.mxu0 %v391
    %2445 = vmatprep.subr.bf16.mxu0 0
    %2446 = vmatpush1.bf16.msra.mxu0 %v390
    %2447 = vmatprep.subr.bf16.mxu0 0
    %2448 = vmatpush1.bf16.msra.mxu0 %v389
    %2449 = vmatprep.subr.bf16.mxu0 0
    %2450 = vmatpush1.bf16.msra.mxu0 %v388
    %2451 = vmatprep.subr.bf16.mxu0 0
    %2452 = vmatpush1.bf16.msra.mxu0 %v387
    %2453 = vmatprep.subr.bf16.mxu0 0
    %2454 = vmatpush1.bf16.msra.mxu0 %v386
    %2455 = vmatprep.subr.bf16.mxu0 0
    %2456 = vmatpush2.bf16.msra.mxu0 0
    %2457 = vmatprep.subr.bf16.mxu0 0
    %2458 = vmatpush2.bf16.msra.mxu0 0
    %2459 = vmatprep.subr.bf16.mxu0 0
    %2460 = vmatpush2.bf16.msra.mxu0 0
    %2461 = vmatprep.subr.bf16.mxu0 0
    %2462 = vmatpush2.bf16.msra.mxu0 0
    %2463 = vmatprep.subr.bf16.mxu0 0
    %2464 = vmatpush2.bf16.msra.mxu0 0
    %2465 = vmatprep.subr.bf16.mxu0 0
    %2466 = vmatpush2.bf16.msra.mxu0 0
    %2467 = vmatprep.subr.bf16.mxu0 0
    %2468 = vmatpush2.bf16.msra.mxu0 0
    %2469 = vmatprep.subr.bf16.mxu0 0
    %2470 = vmatpush2.bf16.msra.mxu0 0
    %2471 = vmatprep.mubr.bf16.mxu0 0
    %2472 = vmatmul.mubr.bf16.gmra.mxu0 %v2437
    %v2473 = vpop.f32.mrf.mxu0
    %v2474 = vadd.f32 %v80, %v2473
    %v2475 = vpop.f32.mrf.mxu0
    %v2476 = vpop.f32.mrf.mxu0
    %v2477 = vpop.f32.mrf.mxu0
    %2478 = vdwg.mxu0
    %v2479 = vadd.f32 %v2474, %v2188
    %2480 = vst.msk [vmem:[#allocation2] sm:$0xff] %vm104, %v2479
    %2482 = vrot.lane.b32.xlu0 %v733, 32
    %v2483 = vpop.permute.xlu0 %2482
    %2486 = vrot.lane.b32.xlu0 %v1024, 64
    %v2487 = vpop.permute.xlu0 %2486
    %2490 = vrot.lane.b32.xlu0 %v1315, 96
    %v2491 = vpop.permute.xlu0 %2490
    %2494 = vrot.lane.b32.xlu0 %v1897, 32
    %v2495 = vpop.permute.xlu0 %2494
    %2498 = vrot.lane.b32.xlu0 %v2188, 64
    %v2499 = vpop.permute.xlu0 %2498
    %2502 = vrot.lane.b32.xlu0 %v2479, 96
    %v2503 = vpop.permute.xlu0 %2502
    %v2505 = vsel %vm104, %v442, %v2483
    %vm2506 = vcmask 523264
    %v2507 = vsel %vm2506, %v2505, %v2487
    %vm2508 = vcmask 785408
    %v2509 = vsel %vm2508, %v2507, %v2491
    %v2510 = vsel %vm104, %v1606, %v2495
    %v2511 = vsel %vm2506, %v2510, %v2499
    %v2512 = vsel %vm2508, %v2511, %v2503
    %v2515 = vcombine.low %v2509, %v2512
    %v2516 = vcombine.high %v2509, %v2512
    %v2518 = vunpack.c.l.s4 1966171168
    %v2519 = vunpack.c.0.s8 %v2518
    %v2520 = vlaneseq
    %v2521 = vshrl.u32 %v2520, 7
    %v2522 = vsub.s32 %v2519, %v2521
    %v2523 = vrot.slane %v2515, %v2522
    %v2525 = vunpack.c.l.s4 1966171168
    %v2526 = vunpack.c.0.s8 %v2525
    %v2527 = vlaneseq
    %v2528 = vshrl.u32 %v2527, 7
    %v2529 = vsub.s32 %v2526, %v2528
    %v2530 = vrot.slane %v2516, %v2529
    %v2531 = vcombine.high %v2523, %v2523
    %v2532 = vcombine.high %v2530, %v2530
    %v2534 = vunpack.c.l.s4 1966171168
    %v2535 = vunpack.c.0.s8 %v2534
    %v2536 = vlaneseq
    %v2537 = vshrl.u32 %v2536, 7
    %v2538 = vsub.s32 %v2535, %v2537
    %v2539 = vrot.slane %v2523, %v2538
    %v2541 = vunpack.c.l.s4 1966171168
    %v2542 = vunpack.c.0.s8 %v2541
    %v2543 = vlaneseq
    %v2544 = vshrl.u32 %v2543, 7
    %v2545 = vsub.s32 %v2542, %v2544
    %v2546 = vrot.slane %v2530, %v2545
    %v2548 = vunpack.c.l.s4 1966171168
    %v2549 = vunpack.c.0.s8 %v2548
    %v2550 = vlaneseq
    %v2551 = vshrl.u32 %v2550, 7
    %v2552 = vsub.s32 %v2549, %v2551
    %v2553 = vrot.slane %v2531, %v2552
    %v2555 = vunpack.c.l.s4 1966171168
    %v2556 = vunpack.c.0.s8 %v2555
    %v2557 = vlaneseq
    %v2558 = vshrl.u32 %v2557, 7
    %v2559 = vsub.s32 %v2556, %v2558
    %v2560 = vrot.slane %v2532, %v2559
    %v2561 = vcombine.high %v2539, %v2539
    %v2562 = vcombine.high %v2546, %v2546
    %v2563 = vcombine.high %v2553, %v2553
    %v2564 = vcombine.high %v2560, %v2560
    %v2573 = vlaneseq
    %vm2574 = vcmp.ge.s32.totalorder %v2573, 0
    %vm2575 = vcmp.lt.s32.totalorder %v2573, 256
    %vm2576 = vmand %vm2574, %vm2575
    %2577 = vst.msk [vmem:[#allocation3] sm:$0x3] %vm2576, %v2539
    %2578 = vst.msk [vmem:[#allocation3 + $0x2] sm:$0x3] %vm2576, %v2553
    %2579 = vst.msk [vmem:[#allocation3 + $0x4] sm:$0x3] %vm2576, %v2561
    %2580 = vst.msk [vmem:[#allocation3 + $0x6] sm:$0x3] %vm2576, %v2563
    %2581 = vst.msk [vmem:[#allocation3 + $0x8] sm:$0x3] %vm2576, %v2546
    %2582 = vst.msk [vmem:[#allocation3 + $0xa] sm:$0x3] %vm2576, %v2560
    %2583 = vst.msk [vmem:[#allocation3 + $0xc] sm:$0x3] %vm2576, %v2562
    %2584 = vst.msk [vmem:[#allocation3 + $0xe] sm:$0x3] %vm2576, %v2564
    // Predicated region
    $region34: #{tpu_custom_call.1} parent=1 // pred_check
      _
    $region35: #{tpu_custom_call.1} parent=1 // pred_check_branch
      %2586 = sbr.rel (0) target = $region37
    $region36: #{tpu_custom_call.1} parent=1 // pred_region
      %s2588 = ssub.s32 256, 256
      %2589 = vsyncadd [#allocation4], %s2588
      %s2590 = sshll.u32 [#allocation3], 4
      %s2591 = int_to_ptr.vmem [resolvable:$true] %s2590
      %2596 = dma.vmem_to_hbm [thread:$0]  %s2591, 256, %s7, [#allocation4], 32, 32, 2
    $region37: #{tpu_custom_call.1} parent=1 // pred_fallthru
      _
    // Predicated region
    $region38: #{tpu_custom_call.1} parent=1 // pred_check
      _
    $region39: #{tpu_custom_call.1} parent=1 // pred_check_branch
      %2598 = sbr.rel (0) target = $region41
    $region40: #{tpu_custom_call.1} parent=1 // pred_region
      %2599 = dma.done [#allocation4], 256
    $region41: #{tpu_custom_call.1} parent=1 // pred_fallthru
      _
    %2600 = vsyncpa [#allocation4], 1

</llo_original>
